<compile_context>
chip_gen: v5e
topology: v5e:2x2
jax: 0.10.0
libtpu: 0.0.40
codegen_flags: <defaults>
</compile_context>

<pallas_src>
import functools
import math

import jax
import jax.numpy as jnp
from jax import lax
from jax.experimental import pallas as pl
from jax.experimental.pallas import tpu as pltpu


# ----------------------------------------------------------------------------
# In-kernel helpers (pure jnp, traced inside the Pallas body)
# ----------------------------------------------------------------------------
def _layernorm(x, gamma, beta, eps=1e-5):
    """torch.nn.LayerNorm over the last axis (biased variance, eps inside sqrt)."""
    mu = jnp.mean(x, axis=-1, keepdims=True)
    xc = x - mu
    var = jnp.mean(xc * xc, axis=-1, keepdims=True)
    return xc * lax.rsqrt(var + eps) * gamma + beta


def _erf(x):
    """Abramowitz & Stegun 7.1.26 erf approximation, |error| <= 1.5e-7."""
    ax = jnp.abs(x)
    t = 1.0 / (1.0 + 0.3275911 * ax)
    poly = t * (0.254829592
                + t * (-0.284496736
                       + t * (1.421413741
                              + t * (-1.453152027 + t * 1.061405429))))
    y = 1.0 - poly * jnp.exp(-ax * ax)
    return jnp.where(x >= 0.0, y, -y)


def _gelu_exact(x):
    """nn.GELU() default (erf-based)."""
    return 0.5 * x * (1.0 + _erf(x * (1.0 / math.sqrt(2.0))))


# ----------------------------------------------------------------------------
# Fused Block kernel: one batch element per grid step.
# ----------------------------------------------------------------------------
def _block_kernel(x_ref,
                  ln1g_ref, ln1b_ref,
                  wqkv_ref, bqkv_ref,
                  wpr_ref, bpr_ref,
                  ln2g_ref, ln2b_ref,
                  wfc_ref, bfc_ref,
                  wp2_ref, bp2_ref,
                  o_ref,
                  *, n_head, head_dim):
    x = x_ref[0]                      # (T, C) f32 residual stream
    C = x.shape[1]

    # ---- ln_1 + attention ---------------------------------------------------
    h = _layernorm(x, ln1g_ref[...], ln1b_ref[...])                    # (T, C)
    qkv = jnp.dot(h.astype(jnp.bfloat16), wqkv_ref[...],
                  preferred_element_type=jnp.float32) + bqkv_ref[...]  # (T, 3C)
    q = qkv[:, :C]
    k = qkv[:, C:2 * C]
    v = qkv[:, 2 * C:]

    scale = 1.0 / math.sqrt(head_dim)
    head_outs = []
    for hh in range(n_head):                       # static unroll over heads
        lo, hi = hh * head_dim, (hh + 1) * head_dim
        qh, kh, vh = q[:, lo:hi], k[:, lo:hi], v[:, lo:hi]   # (T, hd) f32
        # scores = qh @ kh.T  (contract head_dim of both; no explicit transpose)
        s = lax.dot_general(qh, kh, (((1,), (1,)), ((), ())),
                            preferred_element_type=jnp.float32) * scale
        # NOTE: no causal mask — matches F.scaled_dot_product_attention(q, k, v)
        s = s - jnp.max(s, axis=-1, keepdims=True)
        p = jnp.exp(s)
        p = p * (1.0 / jnp.sum(p, axis=-1, keepdims=True))
        head_outs.append(jnp.dot(p, vh, preferred_element_type=jnp.float32))
    y = jnp.concatenate(head_outs, axis=-1)                            # (T, C)

    y = jnp.dot(y.astype(jnp.bfloat16), wpr_ref[...],
                preferred_element_type=jnp.float32) + bpr_ref[...]
    x = x + y                                       # dropout_1: identity (eval)

    # ---- ln_2 + MLP ----------------------------------------------------------
    h2 = _layernorm(x, ln2g_ref[...], ln2b_ref[...])
    m = jnp.dot(h2.astype(jnp.bfloat16), wfc_ref[...],
                preferred_element_type=jnp.float32) + bfc_ref[...]     # (T, 4C)
    m = _gelu_exact(m)
    m = jnp.dot(m.astype(jnp.bfloat16), wp2_ref[...],
                preferred_element_type=jnp.float32) + bp2_ref[...]     # (T, C)

    o_ref[0] = (x + m).astype(o_ref.dtype)          # dropout_2: identity (eval)


def transformer_block(params, x, *, n_head):
    B, T, C = x.shape
    assert C % n_head == 0
    head_dim = C // n_head
    kernel = functools.partial(_block_kernel, n_head=n_head, head_dim=head_dim)

    def full(shape):
        # Whole-array block (weights / biases / LN params), same tile every step.
        return pl.BlockSpec(shape, lambda b, _n=len(shape): (0,) * _n)

    return pl.pallas_call(
        kernel,
        out_shape=jax.ShapeDtypeStruct((B, T, C), x.dtype),
        grid_spec=pltpu.PrefetchScalarGridSpec(
            num_scalar_prefetch=0,
            grid=(B,),
            in_specs=[
                pl.BlockSpec((1, T, C), lambda b: (b, 0, 0)),   # x
                full((1, C)), full((1, C)),                      # ln_1 gamma/beta
                full((C, 3 * C)), full((1, 3 * C)),              # c_attn W^T, b
                full((C, C)), full((1, C)),                      # attn c_proj W^T, b
                full((1, C)), full((1, C)),                      # ln_2 gamma/beta
                full((C, 4 * C)), full((1, 4 * C)),              # mlp c_fc W^T, b
                full((4 * C, C)), full((1, C)),                  # mlp c_proj W^T, b
            ],
            out_specs=pl.BlockSpec((1, T, C), lambda b: (b, 0, 0)),
        ),
        compiler_params=pltpu.CompilerParams(
            dimension_semantics=("parallel",)
        ),
    )(x,
      params["ln1_g"], params["ln1_b"],
      params["w_qkv_t"], params["b_qkv"],
      params["w_attn_proj_t"], params["b_attn_proj"],
      params["ln2_g"], params["ln2_b"],
      params["w_fc_t"], params["b_fc"],
      params["w_mlp_proj_t"], params["b_mlp_proj"])


# ----------------------------------------------------------------------------
# Parameter construction (mirrors nn.Linear / nn.LayerNorm defaults), with the
# weight layout pre-baked once: transpose to (in, out) and cast to bf16.
# ----------------------------------------------------------------------------
def _init_linear(key, in_f, out_f):
    kw, kb = jax.random.split(key)
    bound = 1.0 / math.sqrt(in_f)
    w = jax.random.uniform(kw, (out_f, in_f), jnp.float32, -bound, bound)
    b = jax.random.uniform(kb, (out_f,), jnp.float32, -bound, bound)
    return w, b


def init_block_params(key, n_embd):
    C = n_embd
    k_attn, k_proj, k_fc, k_mproj = jax.random.split(key, 4)
    w_attn, b_attn = _init_linear(k_attn, C, 3 * C)     # c_attn
    w_proj, b_proj = _init_linear(k_proj, C, C)         # attn c_proj
    w_fc, b_fc = _init_linear(k_fc, C, 4 * C)           # mlp c_fc
    w_mproj, b_mproj = _init_linear(k_mproj, 4 * C, C)  # mlp c_proj
    f32 = jnp.float32
    return dict(
        ln1_g=jnp.ones((1, C), f32), ln1_b=jnp.zeros((1, C), f32),
        w_qkv_t=w_attn.T.astype(jnp.bfloat16), b_qkv=b_attn.reshape(1, -1),
        w_attn_proj_t=w_proj.T.astype(jnp.bfloat16), b_attn_proj=b_proj.reshape(1, -1),
        ln2_g=jnp.ones((1, C), f32), ln2_b=jnp.zeros((1, C), f32),
        w_fc_t=w_fc.T.astype(jnp.bfloat16), b_fc=b_fc.reshape(1, -1),
        w_mlp_proj_t=w_mproj.T.astype(jnp.bfloat16), b_mlp_proj=b_mproj.reshape(1, -1),
    )


# ----------------------------------------------------------------------------
if __name__ == "__main__":
    # Small config consistent with the module: n_embd=128 (lane-dense),
    # n_head=4 (head_dim=32), seq T=8, batch B=2.
    n_embd, n_head = 128, 4
    B, T = 2, 8

    key = jax.random.PRNGKey(0)
    k_param, k_x = jax.random.split(key)

    params = init_block_params(k_param, n_embd)
    x = jax.random.normal(k_x, (B, T, n_embd), jnp.float32)

    out = transformer_block(params, x, n_head=n_head)
    jax.block_until_ready(out)
    assert out.shape == (B, T, n_embd), out.shape
    assert out.dtype == jnp.float32
    assert bool(jnp.all(jnp.isfinite(out)))

    print("KERNEL_OK")
</pallas_src>

<mosaic_0001>
module attributes {stable_mosaic.version = 11 : i64} {
  func.func @_block_kernel(%arg0: i32, %arg1: memref<1x8x128xf32, #tpu.memory_space<vmem>>, %arg2: memref<1x128xf32, #tpu.memory_space<vmem>>, %arg3: memref<1x128xf32, #tpu.memory_space<vmem>>, %arg4: memref<128x384xbf16, #tpu.memory_space<vmem>>, %arg5: memref<1x384xf32, #tpu.memory_space<vmem>>, %arg6: memref<128x128xbf16, #tpu.memory_space<vmem>>, %arg7: memref<1x128xf32, #tpu.memory_space<vmem>>, %arg8: memref<1x128xf32, #tpu.memory_space<vmem>>, %arg9: memref<1x128xf32, #tpu.memory_space<vmem>>, %arg10: memref<128x512xbf16, #tpu.memory_space<vmem>>, %arg11: memref<1x512xf32, #tpu.memory_space<vmem>>, %arg12: memref<512x128xbf16, #tpu.memory_space<vmem>>, %arg13: memref<1x128xf32, #tpu.memory_space<vmem>>, %arg14: memref<1x8x128xf32, #tpu.memory_space<vmem>>) attributes {dimension_semantics = [#tpu.dimension_semantics<parallel>], iteration_bounds = array<i64: 2>, scalar_prefetch = 0 : i64, scratch_operands = 0 : i64, tpu.core_type = #tpu.core_type<tc>, window_params = [{transform_indices = @transform_0, window_bounds = array<i64: 1, 8, 128>}, {pipeline_mode = #tpu.pipeline_mode<synchronous>, transform_indices = @transform_1, window_bounds = array<i64: 1, 128>}, {pipeline_mode = #tpu.pipeline_mode<synchronous>, transform_indices = @transform_2, window_bounds = array<i64: 1, 128>}, {pipeline_mode = #tpu.pipeline_mode<synchronous>, transform_indices = @transform_3, window_bounds = array<i64: 128, 384>}, {pipeline_mode = #tpu.pipeline_mode<synchronous>, transform_indices = @transform_4, window_bounds = array<i64: 1, 384>}, {pipeline_mode = #tpu.pipeline_mode<synchronous>, transform_indices = @transform_5, window_bounds = array<i64: 128, 128>}, {pipeline_mode = #tpu.pipeline_mode<synchronous>, transform_indices = @transform_6, window_bounds = array<i64: 1, 128>}, {pipeline_mode = #tpu.pipeline_mode<synchronous>, transform_indices = @transform_7, window_bounds = array<i64: 1, 128>}, {pipeline_mode = #tpu.pipeline_mode<synchronous>, transform_indices = @transform_8, window_bounds = array<i64: 1, 128>}, {pipeline_mode = #tpu.pipeline_mode<synchronous>, transform_indices = @transform_9, window_bounds = array<i64: 128, 512>}, {pipeline_mode = #tpu.pipeline_mode<synchronous>, transform_indices = @transform_10, window_bounds = array<i64: 1, 512>}, {pipeline_mode = #tpu.pipeline_mode<synchronous>, transform_indices = @transform_11, window_bounds = array<i64: 512, 128>}, {pipeline_mode = #tpu.pipeline_mode<synchronous>, transform_indices = @transform_12, window_bounds = array<i64: 1, 128>}, {transform_indices = @transform_13, window_bounds = array<i64: 1, 8, 128>}]} {
    %c0 = arith.constant 0 : index
    %c0_0 = arith.constant 0 : index
    %c0_1 = arith.constant 0 : index
    %0 = vector.load %arg1[%c0, %c0_0, %c0_1] : memref<1x8x128xf32, #tpu.memory_space<vmem>>, vector<1x8x128xf32>
    %1 = vector.shape_cast %0 : vector<1x8x128xf32> to vector<8x128xf32>
    %c0_2 = arith.constant 0 : index
    %c0_3 = arith.constant 0 : index
    %2 = vector.load %arg2[%c0_2, %c0_3] : memref<1x128xf32, #tpu.memory_space<vmem>>, vector<1x128xf32>
    %c0_4 = arith.constant 0 : index
    %c0_5 = arith.constant 0 : index
    %3 = vector.load %arg3[%c0_4, %c0_5] : memref<1x128xf32, #tpu.memory_space<vmem>>, vector<1x128xf32>
    %cst = arith.constant dense<0.000000e+00> : vector<8xf32>
    %4 = vector.multi_reduction <add>, %1, %cst [1] : vector<8x128xf32> to vector<8xf32>
    %5 = vector.shape_cast %4 : vector<8xf32> to vector<8x1xf32>
    %cst_6 = arith.constant 1.280000e+02 : f32
    %6 = vector.broadcast %cst_6 : f32 to vector<8x1xf32>
    %7 = arith.divf %5, %6 : vector<8x1xf32>
    %8 = vector.broadcast %7 : vector<8x1xf32> to vector<8x128xf32>
    %9 = arith.subf %1, %8 : vector<8x128xf32>
    %10 = arith.mulf %9, %9 : vector<8x128xf32>
    %cst_7 = arith.constant dense<0.000000e+00> : vector<8xf32>
    %11 = vector.multi_reduction <add>, %10, %cst_7 [1] : vector<8x128xf32> to vector<8xf32>
    %12 = vector.shape_cast %11 : vector<8xf32> to vector<8x1xf32>
    %cst_8 = arith.constant 1.280000e+02 : f32
    %13 = vector.broadcast %cst_8 : f32 to vector<8x1xf32>
    %14 = arith.divf %12, %13 : vector<8x1xf32>
    %cst_9 = arith.constant 9.99999974E-6 : f32
    %15 = vector.broadcast %cst_9 : f32 to vector<8x1xf32>
    %16 = arith.addf %14, %15 : vector<8x1xf32>
    %17 = math.rsqrt %16 : vector<8x1xf32>
    %18 = vector.broadcast %17 : vector<8x1xf32> to vector<8x128xf32>
    %19 = arith.mulf %9, %18 : vector<8x128xf32>
    %20 = vector.broadcast %2 : vector<1x128xf32> to vector<8x128xf32>
    %21 = arith.mulf %19, %20 : vector<8x128xf32>
    %22 = vector.broadcast %3 : vector<1x128xf32> to vector<8x128xf32>
    %23 = arith.addf %21, %22 : vector<8x128xf32>
    %24 = arith.truncf %23 : vector<8x128xf32> to vector<8x128xbf16>
    %c0_10 = arith.constant 0 : index
    %c0_11 = arith.constant 0 : index
    %25 = vector.load %arg4[%c0_10, %c0_11] : memref<128x384xbf16, #tpu.memory_space<vmem>>, vector<128x384xbf16>
    %cst_12 = arith.constant dense<0.000000e+00> : vector<8x384xf32>
    %26 = tpu.matmul %24, %25, %cst_12 {dimension_numbers = #tpu.dot_dimension_numbers<[1], [0], [0], [1], [0, 0, 1, 1], [], []>} : vector<8x128xbf16>, vector<128x384xbf16>, vector<8x384xf32> -> vector<8x384xf32>
    %c0_13 = arith.constant 0 : index
    %c0_14 = arith.constant 0 : index
    %27 = vector.load %arg5[%c0_13, %c0_14] : memref<1x384xf32, #tpu.memory_space<vmem>>, vector<1x384xf32>
    %28 = vector.broadcast %27 : vector<1x384xf32> to vector<8x384xf32>
    %29 = arith.addf %26, %28 : vector<8x384xf32>
    %30 = vector.extract_strided_slice %29 {offsets = [0, 0], sizes = [8, 128], strides = [1, 1]} : vector<8x384xf32> to vector<8x128xf32>
    %31 = vector.extract_strided_slice %29 {offsets = [0, 128], sizes = [8, 128], strides = [1, 1]} : vector<8x384xf32> to vector<8x128xf32>
    %32 = vector.extract_strided_slice %29 {offsets = [0, 256], sizes = [8, 128], strides = [1, 1]} : vector<8x384xf32> to vector<8x128xf32>
    %33 = vector.extract_strided_slice %30 {offsets = [0, 0], sizes = [8, 32], strides = [1, 1]} : vector<8x128xf32> to vector<8x32xf32>
    %34 = vector.extract_strided_slice %31 {offsets = [0, 0], sizes = [8, 32], strides = [1, 1]} : vector<8x128xf32> to vector<8x32xf32>
    %35 = vector.extract_strided_slice %32 {offsets = [0, 0], sizes = [8, 32], strides = [1, 1]} : vector<8x128xf32> to vector<8x32xf32>
    %cst_15 = arith.constant dense<0.000000e+00> : vector<8x8xf32>
    %36 = tpu.matmul %33, %34, %cst_15 {dimension_numbers = #tpu.dot_dimension_numbers<[1], [1], [0], [0], [0, 0, 1, 0], [], []>} : vector<8x32xf32>, vector<8x32xf32>, vector<8x8xf32> -> vector<8x8xf32>
    %cst_16 = arith.constant 0.176776692 : f32
    %37 = vector.broadcast %cst_16 : f32 to vector<8x8xf32>
    %38 = arith.mulf %36, %37 : vector<8x8xf32>
    %cst_17 = arith.constant dense<0xFF800000> : vector<8xf32>
    %39 = vector.multi_reduction <maximumf>, %38, %cst_17 [1] : vector<8x8xf32> to vector<8xf32>
    %40 = vector.shape_cast %39 : vector<8xf32> to vector<8x1xf32>
    %41 = vector.broadcast %40 : vector<8x1xf32> to vector<8x8xf32>
    %42 = arith.subf %38, %41 : vector<8x8xf32>
    %43 = math.exp %42 : vector<8x8xf32>
    %cst_18 = arith.constant dense<0.000000e+00> : vector<8xf32>
    %44 = vector.multi_reduction <add>, %43, %cst_18 [1] : vector<8x8xf32> to vector<8xf32>
    %45 = vector.shape_cast %44 : vector<8xf32> to vector<8x1xf32>
    %cst_19 = arith.constant 1.000000e+00 : f32
    %46 = vector.broadcast %cst_19 : f32 to vector<8x1xf32>
    %47 = arith.divf %46, %45 : vector<8x1xf32>
    %48 = vector.broadcast %47 : vector<8x1xf32> to vector<8x8xf32>
    %49 = arith.mulf %43, %48 : vector<8x8xf32>
    %cst_20 = arith.constant dense<0.000000e+00> : vector<8x32xf32>
    %50 = tpu.matmul %49, %35, %cst_20 {dimension_numbers = #tpu.dot_dimension_numbers<[1], [0], [0], [1], [0, 0, 1, 1], [], []>} : vector<8x8xf32>, vector<8x32xf32>, vector<8x32xf32> -> vector<8x32xf32>
    %51 = vector.extract_strided_slice %30 {offsets = [0, 32], sizes = [8, 32], strides = [1, 1]} : vector<8x128xf32> to vector<8x32xf32>
    %52 = vector.extract_strided_slice %31 {offsets = [0, 32], sizes = [8, 32], strides = [1, 1]} : vector<8x128xf32> to vector<8x32xf32>
    %53 = vector.extract_strided_slice %32 {offsets = [0, 32], sizes = [8, 32], strides = [1, 1]} : vector<8x128xf32> to vector<8x32xf32>
    %cst_21 = arith.constant dense<0.000000e+00> : vector<8x8xf32>
    %54 = tpu.matmul %51, %52, %cst_21 {dimension_numbers = #tpu.dot_dimension_numbers<[1], [1], [0], [0], [0, 0, 1, 0], [], []>} : vector<8x32xf32>, vector<8x32xf32>, vector<8x8xf32> -> vector<8x8xf32>
    %cst_22 = arith.constant 0.176776692 : f32
    %55 = vector.broadcast %cst_22 : f32 to vector<8x8xf32>
    %56 = arith.mulf %54, %55 : vector<8x8xf32>
    %cst_23 = arith.constant dense<0xFF800000> : vector<8xf32>
    %57 = vector.multi_reduction <maximumf>, %56, %cst_23 [1] : vector<8x8xf32> to vector<8xf32>
    %58 = vector.shape_cast %57 : vector<8xf32> to vector<8x1xf32>
    %59 = vector.broadcast %58 : vector<8x1xf32> to vector<8x8xf32>
    %60 = arith.subf %56, %59 : vector<8x8xf32>
    %61 = math.exp %60 : vector<8x8xf32>
    %cst_24 = arith.constant dense<0.000000e+00> : vector<8xf32>
    %62 = vector.multi_reduction <add>, %61, %cst_24 [1] : vector<8x8xf32> to vector<8xf32>
    %63 = vector.shape_cast %62 : vector<8xf32> to vector<8x1xf32>
    %cst_25 = arith.constant 1.000000e+00 : f32
    %64 = vector.broadcast %cst_25 : f32 to vector<8x1xf32>
    %65 = arith.divf %64, %63 : vector<8x1xf32>
    %66 = vector.broadcast %65 : vector<8x1xf32> to vector<8x8xf32>
    %67 = arith.mulf %61, %66 : vector<8x8xf32>
    %cst_26 = arith.constant dense<0.000000e+00> : vector<8x32xf32>
    %68 = tpu.matmul %67, %53, %cst_26 {dimension_numbers = #tpu.dot_dimension_numbers<[1], [0], [0], [1], [0, 0, 1, 1], [], []>} : vector<8x8xf32>, vector<8x32xf32>, vector<8x32xf32> -> vector<8x32xf32>
    %69 = vector.extract_strided_slice %30 {offsets = [0, 64], sizes = [8, 32], strides = [1, 1]} : vector<8x128xf32> to vector<8x32xf32>
    %70 = vector.extract_strided_slice %31 {offsets = [0, 64], sizes = [8, 32], strides = [1, 1]} : vector<8x128xf32> to vector<8x32xf32>
    %71 = vector.extract_strided_slice %32 {offsets = [0, 64], sizes = [8, 32], strides = [1, 1]} : vector<8x128xf32> to vector<8x32xf32>
    %cst_27 = arith.constant dense<0.000000e+00> : vector<8x8xf32>
    %72 = tpu.matmul %69, %70, %cst_27 {dimension_numbers = #tpu.dot_dimension_numbers<[1], [1], [0], [0], [0, 0, 1, 0], [], []>} : vector<8x32xf32>, vector<8x32xf32>, vector<8x8xf32> -> vector<8x8xf32>
    %cst_28 = arith.constant 0.176776692 : f32
    %73 = vector.broadcast %cst_28 : f32 to vector<8x8xf32>
    %74 = arith.mulf %72, %73 : vector<8x8xf32>
    %cst_29 = arith.constant dense<0xFF800000> : vector<8xf32>
    %75 = vector.multi_reduction <maximumf>, %74, %cst_29 [1] : vector<8x8xf32> to vector<8xf32>
    %76 = vector.shape_cast %75 : vector<8xf32> to vector<8x1xf32>
    %77 = vector.broadcast %76 : vector<8x1xf32> to vector<8x8xf32>
    %78 = arith.subf %74, %77 : vector<8x8xf32>
    %79 = math.exp %78 : vector<8x8xf32>
    %cst_30 = arith.constant dense<0.000000e+00> : vector<8xf32>
    %80 = vector.multi_reduction <add>, %79, %cst_30 [1] : vector<8x8xf32> to vector<8xf32>
    %81 = vector.shape_cast %80 : vector<8xf32> to vector<8x1xf32>
    %cst_31 = arith.constant 1.000000e+00 : f32
    %82 = vector.broadcast %cst_31 : f32 to vector<8x1xf32>
    %83 = arith.divf %82, %81 : vector<8x1xf32>
    %84 = vector.broadcast %83 : vector<8x1xf32> to vector<8x8xf32>
    %85 = arith.mulf %79, %84 : vector<8x8xf32>
    %cst_32 = arith.constant dense<0.000000e+00> : vector<8x32xf32>
    %86 = tpu.matmul %85, %71, %cst_32 {dimension_numbers = #tpu.dot_dimension_numbers<[1], [0], [0], [1], [0, 0, 1, 1], [], []>} : vector<8x8xf32>, vector<8x32xf32>, vector<8x32xf32> -> vector<8x32xf32>
    %87 = vector.extract_strided_slice %30 {offsets = [0, 96], sizes = [8, 32], strides = [1, 1]} : vector<8x128xf32> to vector<8x32xf32>
    %88 = vector.extract_strided_slice %31 {offsets = [0, 96], sizes = [8, 32], strides = [1, 1]} : vector<8x128xf32> to vector<8x32xf32>
    %89 = vector.extract_strided_slice %32 {offsets = [0, 96], sizes = [8, 32], strides = [1, 1]} : vector<8x128xf32> to vector<8x32xf32>
    %cst_33 = arith.constant dense<0.000000e+00> : vector<8x8xf32>
    %90 = tpu.matmul %87, %88, %cst_33 {dimension_numbers = #tpu.dot_dimension_numbers<[1], [1], [0], [0], [0, 0, 1, 0], [], []>} : vector<8x32xf32>, vector<8x32xf32>, vector<8x8xf32> -> vector<8x8xf32>
    %cst_34 = arith.constant 0.176776692 : f32
    %91 = vector.broadcast %cst_34 : f32 to vector<8x8xf32>
    %92 = arith.mulf %90, %91 : vector<8x8xf32>
    %cst_35 = arith.constant dense<0xFF800000> : vector<8xf32>
    %93 = vector.multi_reduction <maximumf>, %92, %cst_35 [1] : vector<8x8xf32> to vector<8xf32>
    %94 = vector.shape_cast %93 : vector<8xf32> to vector<8x1xf32>
    %95 = vector.broadcast %94 : vector<8x1xf32> to vector<8x8xf32>
    %96 = arith.subf %92, %95 : vector<8x8xf32>
    %97 = math.exp %96 : vector<8x8xf32>
    %cst_36 = arith.constant dense<0.000000e+00> : vector<8xf32>
    %98 = vector.multi_reduction <add>, %97, %cst_36 [1] : vector<8x8xf32> to vector<8xf32>
    %99 = vector.shape_cast %98 : vector<8xf32> to vector<8x1xf32>
    %cst_37 = arith.constant 1.000000e+00 : f32
    %100 = vector.broadcast %cst_37 : f32 to vector<8x1xf32>
    %101 = arith.divf %100, %99 : vector<8x1xf32>
    %102 = vector.broadcast %101 : vector<8x1xf32> to vector<8x8xf32>
    %103 = arith.mulf %97, %102 : vector<8x8xf32>
    %cst_38 = arith.constant dense<0.000000e+00> : vector<8x32xf32>
    %104 = tpu.matmul %103, %89, %cst_38 {dimension_numbers = #tpu.dot_dimension_numbers<[1], [0], [0], [1], [0, 0, 1, 1], [], []>} : vector<8x8xf32>, vector<8x32xf32>, vector<8x32xf32> -> vector<8x32xf32>
    %105 = tpu.concatenate %50, %68, %86, %104 in 1 : vector<8x32xf32>, vector<8x32xf32>, vector<8x32xf32>, vector<8x32xf32> -> vector<8x128xf32>
    %106 = arith.truncf %105 : vector<8x128xf32> to vector<8x128xbf16>
    %c0_39 = arith.constant 0 : index
    %c0_40 = arith.constant 0 : index
    %107 = vector.load %arg6[%c0_39, %c0_40] : memref<128x128xbf16, #tpu.memory_space<vmem>>, vector<128x128xbf16>
    %cst_41 = arith.constant dense<0.000000e+00> : vector<8x128xf32>
    %108 = tpu.matmul %106, %107, %cst_41 {dimension_numbers = #tpu.dot_dimension_numbers<[1], [0], [0], [1], [0, 0, 1, 1], [], []>} : vector<8x128xbf16>, vector<128x128xbf16>, vector<8x128xf32> -> vector<8x128xf32>
    %c0_42 = arith.constant 0 : index
    %c0_43 = arith.constant 0 : index
    %109 = vector.load %arg7[%c0_42, %c0_43] : memref<1x128xf32, #tpu.memory_space<vmem>>, vector<1x128xf32>
    %110 = vector.broadcast %109 : vector<1x128xf32> to vector<8x128xf32>
    %111 = arith.addf %108, %110 : vector<8x128xf32>
    %112 = arith.addf %1, %111 : vector<8x128xf32>
    %c0_44 = arith.constant 0 : index
    %c0_45 = arith.constant 0 : index
    %113 = vector.load %arg8[%c0_44, %c0_45] : memref<1x128xf32, #tpu.memory_space<vmem>>, vector<1x128xf32>
    %c0_46 = arith.constant 0 : index
    %c0_47 = arith.constant 0 : index
    %114 = vector.load %arg9[%c0_46, %c0_47] : memref<1x128xf32, #tpu.memory_space<vmem>>, vector<1x128xf32>
    %cst_48 = arith.constant dense<0.000000e+00> : vector<8xf32>
    %115 = vector.multi_reduction <add>, %112, %cst_48 [1] : vector<8x128xf32> to vector<8xf32>
    %116 = vector.shape_cast %115 : vector<8xf32> to vector<8x1xf32>
    %cst_49 = arith.constant 1.280000e+02 : f32
    %117 = vector.broadcast %cst_49 : f32 to vector<8x1xf32>
    %118 = arith.divf %116, %117 : vector<8x1xf32>
    %119 = vector.broadcast %118 : vector<8x1xf32> to vector<8x128xf32>
    %120 = arith.subf %112, %119 : vector<8x128xf32>
    %121 = arith.mulf %120, %120 : vector<8x128xf32>
    %cst_50 = arith.constant dense<0.000000e+00> : vector<8xf32>
    %122 = vector.multi_reduction <add>, %121, %cst_50 [1] : vector<8x128xf32> to vector<8xf32>
    %123 = vector.shape_cast %122 : vector<8xf32> to vector<8x1xf32>
    %cst_51 = arith.constant 1.280000e+02 : f32
    %124 = vector.broadcast %cst_51 : f32 to vector<8x1xf32>
    %125 = arith.divf %123, %124 : vector<8x1xf32>
    %cst_52 = arith.constant 9.99999974E-6 : f32
    %126 = vector.broadcast %cst_52 : f32 to vector<8x1xf32>
    %127 = arith.addf %125, %126 : vector<8x1xf32>
    %128 = math.rsqrt %127 : vector<8x1xf32>
    %129 = vector.broadcast %128 : vector<8x1xf32> to vector<8x128xf32>
    %130 = arith.mulf %120, %129 : vector<8x128xf32>
    %131 = vector.broadcast %113 : vector<1x128xf32> to vector<8x128xf32>
    %132 = arith.mulf %130, %131 : vector<8x128xf32>
    %133 = vector.broadcast %114 : vector<1x128xf32> to vector<8x128xf32>
    %134 = arith.addf %132, %133 : vector<8x128xf32>
    %135 = arith.truncf %134 : vector<8x128xf32> to vector<8x128xbf16>
    %c0_53 = arith.constant 0 : index
    %c0_54 = arith.constant 0 : index
    %136 = vector.load %arg10[%c0_53, %c0_54] : memref<128x512xbf16, #tpu.memory_space<vmem>>, vector<128x512xbf16>
    %cst_55 = arith.constant dense<0.000000e+00> : vector<8x512xf32>
    %137 = tpu.matmul %135, %136, %cst_55 {dimension_numbers = #tpu.dot_dimension_numbers<[1], [0], [0], [1], [0, 0, 1, 1], [], []>} : vector<8x128xbf16>, vector<128x512xbf16>, vector<8x512xf32> -> vector<8x512xf32>
    %c0_56 = arith.constant 0 : index
    %c0_57 = arith.constant 0 : index
    %138 = vector.load %arg11[%c0_56, %c0_57] : memref<1x512xf32, #tpu.memory_space<vmem>>, vector<1x512xf32>
    %139 = vector.broadcast %138 : vector<1x512xf32> to vector<8x512xf32>
    %140 = arith.addf %137, %139 : vector<8x512xf32>
    %cst_58 = arith.constant 5.000000e-01 : f32
    %141 = vector.broadcast %cst_58 : f32 to vector<8x512xf32>
    %142 = arith.mulf %141, %140 : vector<8x512xf32>
    %cst_59 = arith.constant 0.707106769 : f32
    %143 = vector.broadcast %cst_59 : f32 to vector<8x512xf32>
    %144 = arith.mulf %140, %143 : vector<8x512xf32>
    %145 = math.absf %144 : vector<8x512xf32>
    %cst_60 = arith.constant 0.327591091 : f32
    %146 = vector.broadcast %cst_60 : f32 to vector<8x512xf32>
    %147 = arith.mulf %146, %145 : vector<8x512xf32>
    %cst_61 = arith.constant 1.000000e+00 : f32
    %148 = vector.broadcast %cst_61 : f32 to vector<8x512xf32>
    %149 = arith.addf %148, %147 : vector<8x512xf32>
    %cst_62 = arith.constant 1.000000e+00 : f32
    %150 = vector.broadcast %cst_62 : f32 to vector<8x512xf32>
    %151 = arith.divf %150, %149 : vector<8x512xf32>
    %cst_63 = arith.constant 1.06140542 : f32
    %152 = vector.broadcast %cst_63 : f32 to vector<8x512xf32>
    %153 = arith.mulf %151, %152 : vector<8x512xf32>
    %cst_64 = arith.constant -1.45315206 : f32
    %154 = vector.broadcast %cst_64 : f32 to vector<8x512xf32>
    %155 = arith.addf %154, %153 : vector<8x512xf32>
    %156 = arith.mulf %151, %155 : vector<8x512xf32>
    %cst_65 = arith.constant 1.42141378 : f32
    %157 = vector.broadcast %cst_65 : f32 to vector<8x512xf32>
    %158 = arith.addf %157, %156 : vector<8x512xf32>
    %159 = arith.mulf %151, %158 : vector<8x512xf32>
    %cst_66 = arith.constant -0.284496725 : f32
    %160 = vector.broadcast %cst_66 : f32 to vector<8x512xf32>
    %161 = arith.addf %160, %159 : vector<8x512xf32>
    %162 = arith.mulf %151, %161 : vector<8x512xf32>
    %cst_67 = arith.constant 0.254829586 : f32
    %163 = vector.broadcast %cst_67 : f32 to vector<8x512xf32>
    %164 = arith.addf %163, %162 : vector<8x512xf32>
    %165 = arith.mulf %151, %164 : vector<8x512xf32>
    %cst_68 = arith.constant 0.000000e+00 : f32
    %166 = vector.broadcast %cst_68 : f32 to vector<8x512xf32>
    %167 = arith.subf %166, %145 : vector<8x512xf32>
    %168 = arith.mulf %167, %145 : vector<8x512xf32>
    %169 = math.exp %168 : vector<8x512xf32>
    %170 = arith.mulf %165, %169 : vector<8x512xf32>
    %cst_69 = arith.constant 1.000000e+00 : f32
    %171 = vector.broadcast %cst_69 : f32 to vector<8x512xf32>
    %172 = arith.subf %171, %170 : vector<8x512xf32>
    %cst_70 = arith.constant 0.000000e+00 : f32
    %173 = vector.broadcast %cst_70 : f32 to vector<8x512xf32>
    %174 = arith.cmpf oge, %144, %173 : vector<8x512xf32>
    %cst_71 = arith.constant 0.000000e+00 : f32
    %175 = vector.broadcast %cst_71 : f32 to vector<8x512xf32>
    %176 = arith.subf %175, %172 : vector<8x512xf32>
    %177 = arith.select %174, %172, %176 : vector<8x512xi1>, vector<8x512xf32>
    %cst_72 = arith.constant 1.000000e+00 : f32
    %178 = vector.broadcast %cst_72 : f32 to vector<8x512xf32>
    %179 = arith.addf %178, %177 : vector<8x512xf32>
    %180 = arith.mulf %142, %179 : vector<8x512xf32>
    %181 = arith.truncf %180 : vector<8x512xf32> to vector<8x512xbf16>
    %c0_73 = arith.constant 0 : index
    %c0_74 = arith.constant 0 : index
    %182 = vector.load %arg12[%c0_73, %c0_74] : memref<512x128xbf16, #tpu.memory_space<vmem>>, vector<512x128xbf16>
    %cst_75 = arith.constant dense<0.000000e+00> : vector<8x128xf32>
    %183 = tpu.matmul %181, %182, %cst_75 {dimension_numbers = #tpu.dot_dimension_numbers<[1], [0], [0], [1], [0, 0, 1, 1], [], []>} : vector<8x512xbf16>, vector<512x128xbf16>, vector<8x128xf32> -> vector<8x128xf32>
    %c0_76 = arith.constant 0 : index
    %c0_77 = arith.constant 0 : index
    %184 = vector.load %arg13[%c0_76, %c0_77] : memref<1x128xf32, #tpu.memory_space<vmem>>, vector<1x128xf32>
    %185 = vector.broadcast %184 : vector<1x128xf32> to vector<8x128xf32>
    %186 = arith.addf %183, %185 : vector<8x128xf32>
    %187 = arith.addf %112, %186 : vector<8x128xf32>
    %c0_78 = arith.constant 0 : index
    %c0_79 = arith.constant 0 : index
    %c0_80 = arith.constant 0 : index
    %188 = vector.load %arg14[%c0_78, %c0_79, %c0_80] : memref<1x8x128xf32, #tpu.memory_space<vmem>>, vector<1x8x128xf32>
    %189 = vector.shape_cast %188 : vector<1x8x128xf32> to vector<8x128xf32>
    %190 = vector.shape_cast %187 : vector<8x128xf32> to vector<1x8x128xf32>
    tpu.vector_store %arg14[%c0_78, %c0_79, %c0_80], %190 {strides = array<i32>} : memref<1x8x128xf32, #tpu.memory_space<vmem>>, vector<1x8x128xf32>,
    return
  }
  func.func @transform_0(%arg0: i32) -> (i32, i32, i32) {
    %c0_i32 = arith.constant 0 : i32
    %c0_i32_0 = arith.constant 0 : i32
    %c0_i32_1 = arith.constant 0 : i32
    return %arg0, %c0_i32, %c0_i32_0 : i32, i32, i32
  }
  func.func @transform_1(%arg0: i32) -> (i32, i32) {
    %c0_i32 = arith.constant 0 : i32
    %c0_i32_0 = arith.constant 0 : i32
    %c0_i32_1 = arith.constant 0 : i32
    return %c0_i32, %c0_i32_0 : i32, i32
  }
  func.func @transform_2(%arg0: i32) -> (i32, i32) {
    %c0_i32 = arith.constant 0 : i32
    %c0_i32_0 = arith.constant 0 : i32
    %c0_i32_1 = arith.constant 0 : i32
    return %c0_i32, %c0_i32_0 : i32, i32
  }
  func.func @transform_3(%arg0: i32) -> (i32, i32) {
    %c0_i32 = arith.constant 0 : i32
    %c0_i32_0 = arith.constant 0 : i32
    %c0_i32_1 = arith.constant 0 : i32
    return %c0_i32, %c0_i32_0 : i32, i32
  }
  func.func @transform_4(%arg0: i32) -> (i32, i32) {
    %c0_i32 = arith.constant 0 : i32
    %c0_i32_0 = arith.constant 0 : i32
    %c0_i32_1 = arith.constant 0 : i32
    return %c0_i32, %c0_i32_0 : i32, i32
  }
  func.func @transform_5(%arg0: i32) -> (i32, i32) {
    %c0_i32 = arith.constant 0 : i32
    %c0_i32_0 = arith.constant 0 : i32
    %c0_i32_1 = arith.constant 0 : i32
    return %c0_i32, %c0_i32_0 : i32, i32
  }
  func.func @transform_6(%arg0: i32) -> (i32, i32) {
    %c0_i32 = arith.constant 0 : i32
    %c0_i32_0 = arith.constant 0 : i32
    %c0_i32_1 = arith.constant 0 : i32
    return %c0_i32, %c0_i32_0 : i32, i32
  }
  func.func @transform_7(%arg0: i32) -> (i32, i32) {
    %c0_i32 = arith.constant 0 : i32
    %c0_i32_0 = arith.constant 0 : i32
    %c0_i32_1 = arith.constant 0 : i32
    return %c0_i32, %c0_i32_0 : i32, i32
  }
  func.func @transform_8(%arg0: i32) -> (i32, i32) {
    %c0_i32 = arith.constant 0 : i32
    %c0_i32_0 = arith.constant 0 : i32
    %c0_i32_1 = arith.constant 0 : i32
    return %c0_i32, %c0_i32_0 : i32, i32
  }
  func.func @transform_9(%arg0: i32) -> (i32, i32) {
    %c0_i32 = arith.constant 0 : i32
    %c0_i32_0 = arith.constant 0 : i32
    %c0_i32_1 = arith.constant 0 : i32
    return %c0_i32, %c0_i32_0 : i32, i32
  }
  func.func @transform_10(%arg0: i32) -> (i32, i32) {
    %c0_i32 = arith.constant 0 : i32
    %c0_i32_0 = arith.constant 0 : i32
    %c0_i32_1 = arith.constant 0 : i32
    return %c0_i32, %c0_i32_0 : i32, i32
  }
  func.func @transform_11(%arg0: i32) -> (i32, i32) {
    %c0_i32 = arith.constant 0 : i32
    %c0_i32_0 = arith.constant 0 : i32
    %c0_i32_1 = arith.constant 0 : i32
    return %c0_i32, %c0_i32_0 : i32, i32
  }
  func.func @transform_12(%arg0: i32) -> (i32, i32) {
    %c0_i32 = arith.constant 0 : i32
    %c0_i32_0 = arith.constant 0 : i32
    %c0_i32_1 = arith.constant 0 : i32
    return %c0_i32, %c0_i32_0 : i32, i32
  }
  func.func @transform_13(%arg0: i32) -> (i32, i32, i32) {
    %c0_i32 = arith.constant 0 : i32
    %c0_i32_0 = arith.constant 0 : i32
    %c0_i32_1 = arith.constant 0 : i32
    return %arg0, %c0_i32, %c0_i32_0 : i32, i32, i32
  }
}

</mosaic_0001>

<llo_original>
// kernel: tpu_custom_call.1
$region0: #{tpu_custom_call.1}
  #allocation0 [shape = 'u32[]', space=smem, size = 0x4, offset = 0x4, fixed_abs, tag = 'smem constant byte address 0x4 - core index']
  #allocation1 [shape = 'u32[72,128]{1,0:T(1,128)}', space=vmem, size = 0x9000, scoped, tag = 'internal scratch']
  %s0 = inlined_call_operand.hbm [shape: f32[2,8,128], index: 0, kind: input, shape index: {}]
  %s1 = inlined_call_operand.hbm [shape: f32[1,128], index: 1, kind: input, shape index: {}]
  %s2 = inlined_call_operand.hbm [shape: f32[1,128], index: 2, kind: input, shape index: {}]
  %s3 = inlined_call_operand.hbm [shape: bf16[128,384], index: 3, kind: input, shape index: {}]
  %s4 = inlined_call_operand.vmem [shape: f32[1,384], index: 4, kind: input, shape index: {}]
  %s5 = inlined_call_operand.hbm [shape: bf16[128,128], index: 5, kind: input, shape index: {}]
  %s6 = inlined_call_operand.hbm [shape: f32[1,128], index: 6, kind: input, shape index: {}]
  %s7 = inlined_call_operand.hbm [shape: f32[1,128], index: 7, kind: input, shape index: {}]
  %s8 = inlined_call_operand.hbm [shape: f32[1,128], index: 8, kind: input, shape index: {}]
  %s9 = inlined_call_operand.hbm [shape: bf16[128,512], index: 9, kind: input, shape index: {}]
  %s10 = inlined_call_operand.vmem [shape: f32[1,512], index: 10, kind: input, shape index: {}]
  %s11 = inlined_call_operand.hbm [shape: bf16[512,128], index: 11, kind: input, shape index: {}]
  %s12 = inlined_call_operand.vmem [shape: f32[1,128], index: 12, kind: input, shape index: {}]
  %s13 = inlined_call_operand.hbm [shape: f32[2,8,128], index: 13, kind: output, shape index: {}]
  %s14 = sld [smem:[#allocation0]]
  $region125: #{tpu_custom_call.1} parent=0
    _
  %s16 = ssub.s32 1, %s14
  %s17 = scalar_select 0, %s16, %s14
  $region1: #{tpu_custom_call.1} parent=0
    #allocation2 [shape = 'u8[8192]{0}', space=vmem, size = 0x2000, scoped, tag = 'input window, operand 0']
    #allocation3 [shape = 's32[2]{0}', space=sflag, size = 0x8, scoped, tag = 'scoped memory for tpu_custom_call.1']
    #allocation4 [shape = 's32[2]{0}', space=sflag, size = 0x8, scoped, tag = 'scoped memory for tpu_custom_call.1']
    #allocation5 [shape = 'u8[512]{0}', space=vmem, size = 0x400, scoped, tag = 'input window, operand 1, single buffered']
    #allocation6 [shape = 's32[1]{0}', space=sflag, size = 0x4, scoped, tag = 'scoped memory for tpu_custom_call.1']
    #allocation7 [shape = 'u8[512]{0}', space=vmem, size = 0x400, scoped, tag = 'input window, operand 2, single buffered']
    #allocation8 [shape = 'u8[98304]{0}', space=vmem, size = 0x18000, scoped, tag = 'input window, operand 3, single buffered']
    #allocation9 [shape = 's32[1]{0}', space=sflag, size = 0x4, scoped, tag = 'scoped memory for tpu_custom_call.1']
    #allocation10 [shape = 'u8[32768]{0}', space=vmem, size = 0x8000, scoped, tag = 'input window, operand 5, single buffered']
    #allocation11 [shape = 'u8[512]{0}', space=vmem, size = 0x400, scoped, tag = 'input window, operand 6, single buffered']
    #allocation12 [shape = 's32[1]{0}', space=sflag, size = 0x4, scoped, tag = 'scoped memory for tpu_custom_call.1']
    #allocation13 [shape = 'u8[512]{0}', space=vmem, size = 0x400, scoped, tag = 'input window, operand 7, single buffered']
    #allocation14 [shape = 'u8[512]{0}', space=vmem, size = 0x400, scoped, tag = 'input window, operand 8, single buffered']
    #allocation15 [shape = 's32[1]{0}', space=sflag, size = 0x4, scoped, tag = 'scoped memory for tpu_custom_call.1']
    #allocation16 [shape = 'u8[131072]{0}', space=vmem, size = 0x20000, scoped, tag = 'input window, operand 9, single buffered']
    #allocation17 [shape = 'u8[131072]{0}', space=vmem, size = 0x20000, scoped, tag = 'input window, operand 11, single buffered']
    #allocation18 [shape = 's32[1]{0}', space=sflag, size = 0x4, scoped, tag = 'scoped memory for tpu_custom_call.1']
    #allocation19 [shape = 'u8[8192]{0}', space=vmem, size = 0x2000, scoped, tag = 'output window, operand 0']
    %18 = vsyncpa [#allocation3], 0
    %s19 = scalar_lea.sflag [#allocation3], 1
    %20 = vsyncpa %s19, 0
    %21 = vsyncpa [#allocation6], 0
    %22 = vsyncpa [#allocation9], 0
    %23 = vsyncpa [#allocation12], 0
    %24 = vsyncpa [#allocation15], 0
    %25 = vsyncpa [#allocation18], 0
    %26 = vsyncpa [#allocation4], 0
    %s27 = scalar_lea.sflag [#allocation4], 1
    %28 = vsyncpa %s27, 0
    loop: start=0, step=1, limit=4
    $region2: #{tpu_custom_call.1} parent=1 // loop_pre_header
      _
    $region3: #{tpu_custom_call.1} parent=1 // loop_header
      %s30 = sphi 0, %s34
      %p31 = scmp.ge.s32.totalorder %s30, 4
      %s40 = sphi 0, %s42
      %s43 = sphi 0, %s40
      %s44 = sphi 0, %s43
      %s60 = sphi 0, %s44
      %s64 = sphi 0, %s64
      %s66 = sphi 0, %s64
      %s67 = sphi 0, %s66
      %s81 = sphi 0, %s67
      %s85 = sphi 0, %s85
      %s87 = sphi 0, %s85
      %s88 = sphi 0, %s87
      %s102 = sphi 0, %s88
      %s106 = sphi 0, %s106
      %s108 = sphi 0, %s106
      %s109 = sphi 0, %s108
      %s123 = sphi 0, %s109
      %s127 = sphi 0, %s127
      %s129 = sphi 0, %s127
      %s130 = sphi 0, %s129
      %s144 = sphi 0, %s130
      %s148 = sphi 0, %s148
      %s150 = sphi 0, %s148
      %s151 = sphi 0, %s150
      %s165 = sphi 0, %s151
      %s169 = sphi 0, %s169
      %s171 = sphi 0, %s169
      %s172 = sphi 0, %s171
      %s186 = sphi 0, %s172
      %s190 = sphi 0, %s190
      %s192 = sphi 0, %s190
      %s193 = sphi 0, %s192
      %s207 = sphi 0, %s193
      %s211 = sphi 0, %s211
      %s213 = sphi 0, %s211
      %s214 = sphi 0, %s213
      %s228 = sphi 0, %s214
      %s232 = sphi 0, %s232
      %s234 = sphi 0, %s232
      %s235 = sphi 0, %s234
      %s249 = sphi 0, %s235
      %s253 = sphi 0, %s253
      %s255 = sphi 0, %s253
      %s256 = sphi 0, %s255
      %s270 = sphi 0, %s256
      %s274 = sphi 0, %s274
      %s276 = sphi 0, %s274
      %s277 = sphi 0, %s276
      %s291 = sphi 0, %s277
      %s295 = sphi 0, %s295
      %s297 = sphi 0, %s295
      %s298 = sphi 0, %s297
      %s312 = sphi 0, %s298
      %s318 = sphi 0, %s320
      %s321 = sphi 0, %s318
      %s322 = sphi 0, %s321
      %s338 = sphi 0, %s322
    $region4: #{tpu_custom_call.1} parent=1 // loop_header_branch
      %33 = sbr.rel (%p31) target = $region8
    $region5: #{tpu_custom_call.1} parent=1 // loop_body
      %s35 = ssub.s32 %s30, 1
      %s36 = ssub.s32 %s30, 2
      %s37 = sadd.s32 %s30, 1
      %s38 = ssub.s32 %s30, %s37
      %p39 = scmp.eq.s32.totalorder %s38, 0
      %s41 = sadd.s32 %s40, 1
      %s42 = scalar_select %p39, %s40, %s41
      %p45 = pneg %p39
      %p46 = scmp.eq.s32.totalorder %s30, 1
      %p47 = por %p45, %p46
      %p48 = scmp.ne.s32.totalorder %s40, %s43
      %p49 = scmp.eq.s32.totalorder %s30, 0
      %p50 = por %p48, %p49
      %p51 = scmp.ne.s32.totalorder %s40, %s43
      %p52 = scmp.eq.s32.totalorder %s35, 1
      %p53 = por %p51, %p52
      %p54 = scmp.ne.s32.totalorder %s43, %s44
      %p55 = scmp.eq.s32.totalorder %s35, 0
      %p56 = por %p54, %p55
      %p57 = scmp.ne.s32.totalorder %s43, %s44
      %p58 = scmp.eq.s32.totalorder %s36, 1
      %p59 = por %p57, %p58
      %p61 = scmp.ne.s32.totalorder %s44, %s60
      %p62 = scmp.eq.s32.totalorder %s36, 0
      %p63 = por %p61, %p62
      %s65 = sadd.s32 %s64, 1
      %p68 = scmp.eq.s32.totalorder %s30, 1
      %p69 = scmp.ne.s32.totalorder %s64, %s66
      %p70 = scmp.eq.s32.totalorder %s30, 0
      %p71 = por %p69, %p70
      %p72 = scmp.ne.s32.totalorder %s64, %s66
      %p73 = scmp.eq.s32.totalorder %s35, 1
      %p74 = por %p72, %p73
      %p75 = scmp.ne.s32.totalorder %s66, %s67
      %p76 = scmp.eq.s32.totalorder %s35, 0
      %p77 = por %p75, %p76
      %p78 = scmp.ne.s32.totalorder %s66, %s67
      %p79 = scmp.eq.s32.totalorder %s36, 1
      %p80 = por %p78, %p79
      %p82 = scmp.ne.s32.totalorder %s67, %s81
      %p83 = scmp.eq.s32.totalorder %s36, 0
      %p84 = por %p82, %p83
      %s86 = sadd.s32 %s85, 1
      %p89 = scmp.eq.s32.totalorder %s30, 1
      %p90 = scmp.ne.s32.totalorder %s85, %s87
      %p91 = scmp.eq.s32.totalorder %s30, 0
      %p92 = por %p90, %p91
      %p93 = scmp.ne.s32.totalorder %s85, %s87
      %p94 = scmp.eq.s32.totalorder %s35, 1
      %p95 = por %p93, %p94
      %p96 = scmp.ne.s32.totalorder %s87, %s88
      %p97 = scmp.eq.s32.totalorder %s35, 0
      %p98 = por %p96, %p97
      %p99 = scmp.ne.s32.totalorder %s87, %s88
      %p100 = scmp.eq.s32.totalorder %s36, 1
      %p101 = por %p99, %p100
      %p103 = scmp.ne.s32.totalorder %s88, %s102
      %p104 = scmp.eq.s32.totalorder %s36, 0
      %p105 = por %p103, %p104
      %s107 = sadd.s32 %s106, 1
      %p110 = scmp.eq.s32.totalorder %s30, 1
      %p111 = scmp.ne.s32.totalorder %s106, %s108
      %p112 = scmp.eq.s32.totalorder %s30, 0
      %p113 = por %p111, %p112
      %p114 = scmp.ne.s32.totalorder %s106, %s108
      %p115 = scmp.eq.s32.totalorder %s35, 1
      %p116 = por %p114, %p115
      %p117 = scmp.ne.s32.totalorder %s108, %s109
      %p118 = scmp.eq.s32.totalorder %s35, 0
      %p119 = por %p117, %p118
      %p120 = scmp.ne.s32.totalorder %s108, %s109
      %p121 = scmp.eq.s32.totalorder %s36, 1
      %p122 = por %p120, %p121
      %p124 = scmp.ne.s32.totalorder %s109, %s123
      %p125 = scmp.eq.s32.totalorder %s36, 0
      %p126 = por %p124, %p125
      %s128 = sadd.s32 %s127, 1
      %p131 = scmp.eq.s32.totalorder %s30, 1
      %p132 = scmp.ne.s32.totalorder %s127, %s129
      %p133 = scmp.eq.s32.totalorder %s30, 0
      %p134 = por %p132, %p133
      %p135 = scmp.ne.s32.totalorder %s127, %s129
      %p136 = scmp.eq.s32.totalorder %s35, 1
      %p137 = por %p135, %p136
      %p138 = scmp.ne.s32.totalorder %s129, %s130
      %p139 = scmp.eq.s32.totalorder %s35, 0
      %p140 = por %p138, %p139
      %p141 = scmp.ne.s32.totalorder %s129, %s130
      %p142 = scmp.eq.s32.totalorder %s36, 1
      %p143 = por %p141, %p142
      %p145 = scmp.ne.s32.totalorder %s130, %s144
      %p146 = scmp.eq.s32.totalorder %s36, 0
      %p147 = por %p145, %p146
      %s149 = sadd.s32 %s148, 1
      %p152 = scmp.eq.s32.totalorder %s30, 1
      %p153 = scmp.ne.s32.totalorder %s148, %s150
      %p154 = scmp.eq.s32.totalorder %s30, 0
      %p155 = por %p153, %p154
      %p156 = scmp.ne.s32.totalorder %s148, %s150
      %p157 = scmp.eq.s32.totalorder %s35, 1
      %p158 = por %p156, %p157
      %p159 = scmp.ne.s32.totalorder %s150, %s151
      %p160 = scmp.eq.s32.totalorder %s35, 0
      %p161 = por %p159, %p160
      %p162 = scmp.ne.s32.totalorder %s150, %s151
      %p163 = scmp.eq.s32.totalorder %s36, 1
      %p164 = por %p162, %p163
      %p166 = scmp.ne.s32.totalorder %s151, %s165
      %p167 = scmp.eq.s32.totalorder %s36, 0
      %p168 = por %p166, %p167
      %s170 = sadd.s32 %s169, 1
      %p173 = scmp.eq.s32.totalorder %s30, 1
      %p174 = scmp.ne.s32.totalorder %s169, %s171
      %p175 = scmp.eq.s32.totalorder %s30, 0
      %p176 = por %p174, %p175
      %p177 = scmp.ne.s32.totalorder %s169, %s171
      %p178 = scmp.eq.s32.totalorder %s35, 1
      %p179 = por %p177, %p178
      %p180 = scmp.ne.s32.totalorder %s171, %s172
      %p181 = scmp.eq.s32.totalorder %s35, 0
      %p182 = por %p180, %p181
      %p183 = scmp.ne.s32.totalorder %s171, %s172
      %p184 = scmp.eq.s32.totalorder %s36, 1
      %p185 = por %p183, %p184
      %p187 = scmp.ne.s32.totalorder %s172, %s186
      %p188 = scmp.eq.s32.totalorder %s36, 0
      %p189 = por %p187, %p188
      %s191 = sadd.s32 %s190, 1
      %p194 = scmp.eq.s32.totalorder %s30, 1
      %p195 = scmp.ne.s32.totalorder %s190, %s192
      %p196 = scmp.eq.s32.totalorder %s30, 0
      %p197 = por %p195, %p196
      %p198 = scmp.ne.s32.totalorder %s190, %s192
      %p199 = scmp.eq.s32.totalorder %s35, 1
      %p200 = por %p198, %p199
      %p201 = scmp.ne.s32.totalorder %s192, %s193
      %p202 = scmp.eq.s32.totalorder %s35, 0
      %p203 = por %p201, %p202
      %p204 = scmp.ne.s32.totalorder %s192, %s193
      %p205 = scmp.eq.s32.totalorder %s36, 1
      %p206 = por %p204, %p205
      %p208 = scmp.ne.s32.totalorder %s193, %s207
      %p209 = scmp.eq.s32.totalorder %s36, 0
      %p210 = por %p208, %p209
      %s212 = sadd.s32 %s211, 1
      %p215 = scmp.eq.s32.totalorder %s30, 1
      %p216 = scmp.ne.s32.totalorder %s211, %s213
      %p217 = scmp.eq.s32.totalorder %s30, 0
      %p218 = por %p216, %p217
      %p219 = scmp.ne.s32.totalorder %s211, %s213
      %p220 = scmp.eq.s32.totalorder %s35, 1
      %p221 = por %p219, %p220
      %p222 = scmp.ne.s32.totalorder %s213, %s214
      %p223 = scmp.eq.s32.totalorder %s35, 0
      %p224 = por %p222, %p223
      %p225 = scmp.ne.s32.totalorder %s213, %s214
      %p226 = scmp.eq.s32.totalorder %s36, 1
      %p227 = por %p225, %p226
      %p229 = scmp.ne.s32.totalorder %s214, %s228
      %p230 = scmp.eq.s32.totalorder %s36, 0
      %p231 = por %p229, %p230
      %s233 = sadd.s32 %s232, 1
      %p236 = scmp.eq.s32.totalorder %s30, 1
      %p237 = scmp.ne.s32.totalorder %s232, %s234
      %p238 = scmp.eq.s32.totalorder %s30, 0
      %p239 = por %p237, %p238
      %p240 = scmp.ne.s32.totalorder %s232, %s234
      %p241 = scmp.eq.s32.totalorder %s35, 1
      %p242 = por %p240, %p241
      %p243 = scmp.ne.s32.totalorder %s234, %s235
      %p244 = scmp.eq.s32.totalorder %s35, 0
      %p245 = por %p243, %p244
      %p246 = scmp.ne.s32.totalorder %s234, %s235
      %p247 = scmp.eq.s32.totalorder %s36, 1
      %p248 = por %p246, %p247
      %p250 = scmp.ne.s32.totalorder %s235, %s249
      %p251 = scmp.eq.s32.totalorder %s36, 0
      %p252 = por %p250, %p251
      %s254 = sadd.s32 %s253, 1
      %p257 = scmp.eq.s32.totalorder %s30, 1
      %p258 = scmp.ne.s32.totalorder %s253, %s255
      %p259 = scmp.eq.s32.totalorder %s30, 0
      %p260 = por %p258, %p259
      %p261 = scmp.ne.s32.totalorder %s253, %s255
      %p262 = scmp.eq.s32.totalorder %s35, 1
      %p263 = por %p261, %p262
      %p264 = scmp.ne.s32.totalorder %s255, %s256
      %p265 = scmp.eq.s32.totalorder %s35, 0
      %p266 = por %p264, %p265
      %p267 = scmp.ne.s32.totalorder %s255, %s256
      %p268 = scmp.eq.s32.totalorder %s36, 1
      %p269 = por %p267, %p268
      %p271 = scmp.ne.s32.totalorder %s256, %s270
      %p272 = scmp.eq.s32.totalorder %s36, 0
      %p273 = por %p271, %p272
      %s275 = sadd.s32 %s274, 1
      %p278 = scmp.eq.s32.totalorder %s30, 1
      %p279 = scmp.ne.s32.totalorder %s274, %s276
      %p280 = scmp.eq.s32.totalorder %s30, 0
      %p281 = por %p279, %p280
      %p282 = scmp.ne.s32.totalorder %s274, %s276
      %p283 = scmp.eq.s32.totalorder %s35, 1
      %p284 = por %p282, %p283
      %p285 = scmp.ne.s32.totalorder %s276, %s277
      %p286 = scmp.eq.s32.totalorder %s35, 0
      %p287 = por %p285, %p286
      %p288 = scmp.ne.s32.totalorder %s276, %s277
      %p289 = scmp.eq.s32.totalorder %s36, 1
      %p290 = por %p288, %p289
      %p292 = scmp.ne.s32.totalorder %s277, %s291
      %p293 = scmp.eq.s32.totalorder %s36, 0
      %p294 = por %p292, %p293
      %s296 = sadd.s32 %s295, 1
      %p299 = scmp.eq.s32.totalorder %s30, 1
      %p300 = scmp.ne.s32.totalorder %s295, %s297
      %p301 = scmp.eq.s32.totalorder %s30, 0
      %p302 = por %p300, %p301
      %p303 = scmp.ne.s32.totalorder %s295, %s297
      %p304 = scmp.eq.s32.totalorder %s35, 1
      %p305 = por %p303, %p304
      %p306 = scmp.ne.s32.totalorder %s297, %s298
      %p307 = scmp.eq.s32.totalorder %s35, 0
      %p308 = por %p306, %p307
      %p309 = scmp.ne.s32.totalorder %s297, %s298
      %p310 = scmp.eq.s32.totalorder %s36, 1
      %p311 = por %p309, %p310
      %p313 = scmp.ne.s32.totalorder %s298, %s312
      %p314 = scmp.eq.s32.totalorder %s36, 0
      %p315 = por %p313, %p314
      %s316 = ssub.s32 %s30, %s37
      %p317 = scmp.eq.s32.totalorder %s316, 0
      %s319 = sadd.s32 %s318, 1
      %s320 = scalar_select %p317, %s318, %s319
      %p323 = pneg %p317
      %p324 = scmp.eq.s32.totalorder %s30, 1
      %p325 = por %p323, %p324
      %p326 = scmp.ne.s32.totalorder %s318, %s321
      %p327 = scmp.eq.s32.totalorder %s30, 0
      %p328 = por %p326, %p327
      %p329 = scmp.ne.s32.totalorder %s318, %s321
      %p330 = scmp.eq.s32.totalorder %s35, 1
      %p331 = por %p329, %p330
      %p332 = scmp.ne.s32.totalorder %s321, %s322
      %p333 = scmp.eq.s32.totalorder %s35, 0
      %p334 = por %p332, %p333
      %p335 = scmp.ne.s32.totalorder %s321, %s322
      %p336 = scmp.eq.s32.totalorder %s36, 1
      %p337 = por %p335, %p336
      %p339 = scmp.ne.s32.totalorder %s322, %s338
      %p340 = scmp.eq.s32.totalorder %s36, 0
      %p341 = por %p339, %p340
      %p342 = scmp.le.s32.totalorder 1, %s30
      %p343 = scmp.lt.s32.totalorder %s30, 3
      %p344 = pnand %p342, %p343
      %p345 = pneg %p344
      // Predicated region
      $region9: #{tpu_custom_call.1} parent=5 // pred_check
        _
      $region10: #{tpu_custom_call.1} parent=5 // pred_check_branch
        %347 = sbr.rel (%p344) target = $region12
      $region11: #{tpu_custom_call.1} parent=5 // pred_region
        %s348 = ssub.s32 %s30, 1
        // Predicated region
        $region13: #{tpu_custom_call.1} parent=11 // pred_check
          %p349 = pneg %p77
        $region14: #{tpu_custom_call.1} parent=11 // pred_check_branch
          %351 = sbr.rel (%p349) target = $region16
        $region15: #{tpu_custom_call.1} parent=11 // pred_region
          %353 = vsyncadd [#allocation6], 0
          %s355 = sshll.u32 %s1, 4
          %s356 = int_to_ptr.hbm [resolvable:$true] %s355
          %s357 = sshll.u32 [#allocation5], 4
          %s358 = int_to_ptr.vmem [resolvable:$true] %s357
          %360 = dma.hbm_to_vmem [thread:$0]  %s356, 16, %s358, [#allocation6]
        $region16: #{tpu_custom_call.1} parent=11 // pred_fallthru
          _
        // Predicated region
        $region17: #{tpu_custom_call.1} parent=11 // pred_check
          %p361 = pneg %p98
        $region18: #{tpu_custom_call.1} parent=11 // pred_check_branch
          %363 = sbr.rel (%p361) target = $region20
        $region19: #{tpu_custom_call.1} parent=11 // pred_region
          %365 = vsyncadd [#allocation6], 0
          %s367 = sshll.u32 %s2, 4
          %s368 = int_to_ptr.hbm [resolvable:$true] %s367
          %s369 = sshll.u32 [#allocation7], 4
          %s370 = int_to_ptr.vmem [resolvable:$true] %s369
          %372 = dma.hbm_to_vmem [thread:$0]  %s368, 16, %s370, [#allocation6]
        $region20: #{tpu_custom_call.1} parent=11 // pred_fallthru
          _
        // Predicated region
        $region21: #{tpu_custom_call.1} parent=11 // pred_check
          %p373 = pneg %p119
        $region22: #{tpu_custom_call.1} parent=11 // pred_check_branch
          %375 = sbr.rel (%p373) target = $region24
        $region23: #{tpu_custom_call.1} parent=11 // pred_region
          %377 = vsyncadd [#allocation9], 0
          %s378 = sshll.u32 %s3, 4
          %s379 = int_to_ptr.hbm [resolvable:$true] %s378
          %s380 = sshll.u32 [#allocation8], 4
          %s381 = int_to_ptr.vmem [resolvable:$true] %s380
          %386 = dma.hbm_to_vmem [thread:$0]  %s379, 3072, %s381, [#allocation9], 192, 192, 12
        $region24: #{tpu_custom_call.1} parent=11 // pred_fallthru
          _
        // Predicated region
        $region25: #{tpu_custom_call.1} parent=11 // pred_check
          %p387 = pneg %p140
        $region26: #{tpu_custom_call.1} parent=11 // pred_check_branch
          %389 = sbr.rel (%p387) target = $region28
        $region27: #{tpu_custom_call.1} parent=11 // pred_region
          _
        $region28: #{tpu_custom_call.1} parent=11 // pred_fallthru
          _
        // Predicated region
        $region29: #{tpu_custom_call.1} parent=11 // pred_check
          %p390 = pneg %p161
        $region30: #{tpu_custom_call.1} parent=11 // pred_check_branch
          %392 = sbr.rel (%p390) target = $region32
        $region31: #{tpu_custom_call.1} parent=11 // pred_region
          %394 = vsyncadd [#allocation9], 0
          %s395 = sshll.u32 %s5, 4
          %s396 = int_to_ptr.hbm [resolvable:$true] %s395
          %s397 = sshll.u32 [#allocation10], 4
          %s398 = int_to_ptr.vmem [resolvable:$true] %s397
          %403 = dma.hbm_to_vmem [thread:$0]  %s396, 1024, %s398, [#allocation9], 64, 64, 4
        $region32: #{tpu_custom_call.1} parent=11 // pred_fallthru
          _
        // Predicated region
        $region33: #{tpu_custom_call.1} parent=11 // pred_check
          %p404 = pneg %p182
        $region34: #{tpu_custom_call.1} parent=11 // pred_check_branch
          %406 = sbr.rel (%p404) target = $region36
        $region35: #{tpu_custom_call.1} parent=11 // pred_region
          %408 = vsyncadd [#allocation12], 0
          %s410 = sshll.u32 %s6, 4
          %s411 = int_to_ptr.hbm [resolvable:$true] %s410
          %s412 = sshll.u32 [#allocation11], 4
          %s413 = int_to_ptr.vmem [resolvable:$true] %s412
          %415 = dma.hbm_to_vmem [thread:$0]  %s411, 16, %s413, [#allocation12]
        $region36: #{tpu_custom_call.1} parent=11 // pred_fallthru
          _
        // Predicated region
        $region37: #{tpu_custom_call.1} parent=11 // pred_check
          %p416 = pneg %p203
        $region38: #{tpu_custom_call.1} parent=11 // pred_check_branch
          %418 = sbr.rel (%p416) target = $region40
        $region39: #{tpu_custom_call.1} parent=11 // pred_region
          %420 = vsyncadd [#allocation12], 0
          %s422 = sshll.u32 %s7, 4
          %s423 = int_to_ptr.hbm [resolvable:$true] %s422
          %s424 = sshll.u32 [#allocation13], 4
          %s425 = int_to_ptr.vmem [resolvable:$true] %s424
          %427 = dma.hbm_to_vmem [thread:$0]  %s423, 16, %s425, [#allocation12]
        $region40: #{tpu_custom_call.1} parent=11 // pred_fallthru
          _
        // Predicated region
        $region41: #{tpu_custom_call.1} parent=11 // pred_check
          %p428 = pneg %p224
        $region42: #{tpu_custom_call.1} parent=11 // pred_check_branch
          %430 = sbr.rel (%p428) target = $region44
        $region43: #{tpu_custom_call.1} parent=11 // pred_region
          %432 = vsyncadd [#allocation15], 0
          %s434 = sshll.u32 %s8, 4
          %s435 = int_to_ptr.hbm [resolvable:$true] %s434
          %s436 = sshll.u32 [#allocation14], 4
          %s437 = int_to_ptr.vmem [resolvable:$true] %s436
          %439 = dma.hbm_to_vmem [thread:$0]  %s435, 16, %s437, [#allocation15]
        $region44: #{tpu_custom_call.1} parent=11 // pred_fallthru
          _
        // Predicated region
        $region45: #{tpu_custom_call.1} parent=11 // pred_check
          %p440 = pneg %p245
        $region46: #{tpu_custom_call.1} parent=11 // pred_check_branch
          %442 = sbr.rel (%p440) target = $region48
        $region47: #{tpu_custom_call.1} parent=11 // pred_region
          %444 = vsyncadd [#allocation15], 0
          %s445 = sshll.u32 %s9, 4
          %s446 = int_to_ptr.hbm [resolvable:$true] %s445
          %s447 = sshll.u32 [#allocation16], 4
          %s448 = int_to_ptr.vmem [resolvable:$true] %s447
          %453 = dma.hbm_to_vmem [thread:$0]  %s446, 4096, %s448, [#allocation15], 256, 256, 16
        $region48: #{tpu_custom_call.1} parent=11 // pred_fallthru
          _
        // Predicated region
        $region49: #{tpu_custom_call.1} parent=11 // pred_check
          %p454 = pneg %p266
        $region50: #{tpu_custom_call.1} parent=11 // pred_check_branch
          %456 = sbr.rel (%p454) target = $region52
        $region51: #{tpu_custom_call.1} parent=11 // pred_region
          _
        $region52: #{tpu_custom_call.1} parent=11 // pred_fallthru
          _
        // Predicated region
        $region53: #{tpu_custom_call.1} parent=11 // pred_check
          %p457 = pneg %p287
        $region54: #{tpu_custom_call.1} parent=11 // pred_check_branch
          %459 = sbr.rel (%p457) target = $region56
        $region55: #{tpu_custom_call.1} parent=11 // pred_region
          %461 = vsyncadd [#allocation18], 0
          %s462 = sshll.u32 %s11, 4
          %s463 = int_to_ptr.hbm [resolvable:$true] %s462
          %s464 = sshll.u32 [#allocation17], 4
          %s465 = int_to_ptr.vmem [resolvable:$true] %s464
          %470 = dma.hbm_to_vmem [thread:$0]  %s463, 4096, %s465, [#allocation18], 64, 64, 4
        $region56: #{tpu_custom_call.1} parent=11 // pred_fallthru
          _
        // Predicated region
        $region57: #{tpu_custom_call.1} parent=11 // pred_check
          %p471 = pneg %p308
        $region58: #{tpu_custom_call.1} parent=11 // pred_check_branch
          %473 = sbr.rel (%p471) target = $region60
        $region59: #{tpu_custom_call.1} parent=11 // pred_region
          _
        $region60: #{tpu_custom_call.1} parent=11 // pred_fallthru
          _
      $region12: #{tpu_custom_call.1} parent=5 // pred_fallthru
        _
      %p474 = scmp.lt.s32.totalorder %s30, 2
      // Predicated region
      $region61: #{tpu_custom_call.1} parent=5 // pred_check
        %p475 = pneg %p474
      $region62: #{tpu_custom_call.1} parent=5 // pred_check_branch
        %477 = sbr.rel (%p475) target = $region64
      $region63: #{tpu_custom_call.1} parent=5 // pred_region
        // Predicated region
        $region65: #{tpu_custom_call.1} parent=63 // pred_check
          %p478 = pneg %p50
        $region66: #{tpu_custom_call.1} parent=63 // pred_check_branch
          %480 = sbr.rel (%p478) target = $region68
        $region67: #{tpu_custom_call.1} parent=63 // pred_region
          %s481 = sand.u32 %s40, 1
          %s482 = scalar_lea.sflag [#allocation3], %s481
          %s483 = sand.u32 %s40, 1
          %s484 = smul.addr %s483, 8
          %s485 = scalar_lea.vmem [#allocation2], %s484
          %487 = vsyncadd %s482, 0
          %s488 = smul.addr %s30, 8
          %s489 = scalar_lea.hbm %s0, %s488
          %s491 = sshll.u32 %s489, 4
          %s492 = int_to_ptr.hbm [resolvable:$true] %s491
          %s493 = sshll.u32 %s485, 4
          %s494 = int_to_ptr.vmem [resolvable:$true] %s493
          %496 = dma.hbm_to_vmem [thread:$0]  %s492, 128, %s494, %s482
        $region68: #{tpu_custom_call.1} parent=63 // pred_fallthru
          _
      $region64: #{tpu_custom_call.1} parent=5 // pred_fallthru
        _
      %p497 = scmp.le.s32.totalorder 1, %s30
      %p498 = scmp.lt.s32.totalorder %s30, 3
      %p499 = pnand %p497, %p498
      %p500 = pneg %p499
      // Predicated region
      $region69: #{tpu_custom_call.1} parent=5 // pred_check
        _
      $region70: #{tpu_custom_call.1} parent=5 // pred_check_branch
        %502 = sbr.rel (%p499) target = $region72
      $region71: #{tpu_custom_call.1} parent=5 // pred_region
        %s503 = ssub.s32 %s30, 1
        %s504 = sand.u32 %s43, 1
        %s505 = scalar_lea.sflag [#allocation3], %s504
        %s506 = sand.u32 %s43, 1
        %s507 = smul.addr %s506, 8
        %s508 = scalar_lea.vmem [#allocation2], %s507
        // Predicated region
        $region73: #{tpu_custom_call.1} parent=71 // pred_check
          %p509 = pneg %p56
        $region74: #{tpu_custom_call.1} parent=71 // pred_check_branch
          %511 = sbr.rel (%p509) target = $region76
        $region75: #{tpu_custom_call.1} parent=71 // pred_region
          %513 = dma.done %s505, 128
        $region76: #{tpu_custom_call.1} parent=71 // pred_fallthru
          _
        // Predicated region
        $region77: #{tpu_custom_call.1} parent=71 // pred_check
          %p514 = pneg %p77
        $region78: #{tpu_custom_call.1} parent=71 // pred_check_branch
          %516 = sbr.rel (%p514) target = $region80
        $region79: #{tpu_custom_call.1} parent=71 // pred_region
          %518 = dma.done [#allocation6], 16
        $region80: #{tpu_custom_call.1} parent=71 // pred_fallthru
          _
        // Predicated region
        $region81: #{tpu_custom_call.1} parent=71 // pred_check
          %p519 = pneg %p98
        $region82: #{tpu_custom_call.1} parent=71 // pred_check_branch
          %521 = sbr.rel (%p519) target = $region84
        $region83: #{tpu_custom_call.1} parent=71 // pred_region
          %523 = dma.done [#allocation6], 16
        $region84: #{tpu_custom_call.1} parent=71 // pred_fallthru
          _
        // Predicated region
        $region85: #{tpu_custom_call.1} parent=71 // pred_check
          %p524 = pneg %p119
        $region86: #{tpu_custom_call.1} parent=71 // pred_check_branch
          %526 = sbr.rel (%p524) target = $region88
        $region87: #{tpu_custom_call.1} parent=71 // pred_region
          %528 = dma.done [#allocation9], 3072
        $region88: #{tpu_custom_call.1} parent=71 // pred_fallthru
          _
        // Predicated region
        $region89: #{tpu_custom_call.1} parent=71 // pred_check
          %p529 = pneg %p161
        $region90: #{tpu_custom_call.1} parent=71 // pred_check_branch
          %531 = sbr.rel (%p529) target = $region92
        $region91: #{tpu_custom_call.1} parent=71 // pred_region
          %533 = dma.done [#allocation9], 1024
        $region92: #{tpu_custom_call.1} parent=71 // pred_fallthru
          _
        // Predicated region
        $region93: #{tpu_custom_call.1} parent=71 // pred_check
          %p534 = pneg %p182
        $region94: #{tpu_custom_call.1} parent=71 // pred_check_branch
          %536 = sbr.rel (%p534) target = $region96
        $region95: #{tpu_custom_call.1} parent=71 // pred_region
          %538 = dma.done [#allocation12], 16
        $region96: #{tpu_custom_call.1} parent=71 // pred_fallthru
          _
        // Predicated region
        $region97: #{tpu_custom_call.1} parent=71 // pred_check
          %p539 = pneg %p203
        $region98: #{tpu_custom_call.1} parent=71 // pred_check_branch
          %541 = sbr.rel (%p539) target = $region100
        $region99: #{tpu_custom_call.1} parent=71 // pred_region
          %543 = dma.done [#allocation12], 16
        $region100: #{tpu_custom_call.1} parent=71 // pred_fallthru
          _
        // Predicated region
        $region101: #{tpu_custom_call.1} parent=71 // pred_check
          %p544 = pneg %p224
        $region102: #{tpu_custom_call.1} parent=71 // pred_check_branch
          %546 = sbr.rel (%p544) target = $region104
        $region103: #{tpu_custom_call.1} parent=71 // pred_region
          %548 = dma.done [#allocation15], 16
        $region104: #{tpu_custom_call.1} parent=71 // pred_fallthru
          _
        // Predicated region
        $region105: #{tpu_custom_call.1} parent=71 // pred_check
          %p549 = pneg %p245
        $region106: #{tpu_custom_call.1} parent=71 // pred_check_branch
          %551 = sbr.rel (%p549) target = $region108
        $region107: #{tpu_custom_call.1} parent=71 // pred_region
          %553 = dma.done [#allocation15], 4096
        $region108: #{tpu_custom_call.1} parent=71 // pred_fallthru
          _
        // Predicated region
        $region109: #{tpu_custom_call.1} parent=71 // pred_check
          %p554 = pneg %p287
        $region110: #{tpu_custom_call.1} parent=71 // pred_check_branch
          %556 = sbr.rel (%p554) target = $region112
        $region111: #{tpu_custom_call.1} parent=71 // pred_region
          %558 = dma.done [#allocation18], 4096
        $region112: #{tpu_custom_call.1} parent=71 // pred_fallthru
          _
        %s559 = sand.u32 %s43, 1
        %s560 = scalar_lea.sflag [#allocation3], %s559
        %s561 = sand.u32 %s43, 1
        %s562 = smul.addr %s561, 8
        %s563 = scalar_lea.vmem [#allocation2], %s562
        %p564 = pneg %p56
        %p565 = pneg %p53
        %p566 = pneg %p77
        %p567 = pneg %p74
        %p568 = pneg %p98
        %p569 = pneg %p95
        %p570 = pneg %p119
        %p571 = pneg %p116
        %p572 = pneg %p140
        %p573 = pneg %p137
        %p574 = pneg %p161
        %p575 = pneg %p158
        %p576 = pneg %p182
        %p577 = pneg %p179
        %p578 = pneg %p203
        %p579 = pneg %p200
        %p580 = pneg %p224
        %p581 = pneg %p221
        %p582 = pneg %p245
        %p583 = pneg %p242
        %p584 = pneg %p266
        %p585 = pneg %p263
        %p586 = pneg %p287
        %p587 = pneg %p284
        %p588 = pneg %p308
        %p589 = pneg %p305
        %p590 = pneg %p334
        %p591 = pneg %p331
        %s592 = sand.u32 %s321, 1
        %s593 = scalar_lea.sflag [#allocation4], %s592
        %s594 = sand.u32 %s321, 1
        %s595 = smul.addr %s594, 8
        %s596 = scalar_lea.vmem [#allocation19], %s595
        %v597 = vld [vmem:[%s508] sm:$0xff]
        %v598 = vld [vmem:[#allocation5] sm:$0x1]
        %v599 = vld [vmem:[#allocation7] sm:$0x1]
        %600 = vadd.xlane.f32.xlu0 %v597
        %v601 = vpop.xlane.xlu0 %600
        %v602 = vrcp.pop 128.0
        %v603 = vmul.f32 128.0, %v602
        %v604 = vsub.f32 1.0, %v603
        %v605 = vmul.f32 %v602, %v604
        %v606 = vadd.f32 %v602, %v605
        %vm607 = vweird.f32 %v602
        %v608 = vsel %vm607, %v602, %v606
        %v609 = vmul.f32 %v601, %v608
        %v610 = vsub.f32 %v597, %v609
        %v611 = vmul.f32 %v610, %v610
        %612 = vadd.xlane.f32.xlu0 %v611
        %v613 = vpop.xlane.xlu0 %612
        %v614 = vmul.f32 %v613, %v608
        %v615 = vadd.f32 %v614, 1e-05
        %v616 = vrsqrt.pop %v615
        %v617 = vmul.f32 %v616, %v615
        %v618 = vmul.f32 %v617, %v616
        %v619 = vmul.f32 0.5, %v618
        %v620 = vsub.f32 1.5, %v619
        %v621 = vmul.f32 %v616, %v620
        %vm622 = vweird.f32 %v615
        %vm623 = vweird.f32 %v616
        %vm624 = vmor %vm622, %vm623
        %v625 = vsel %vm624, %v616, %v621
        %v626 = vmul.f32 %v610, %v625
        %v628 = vperm.slane %v598, 0
        %v630 = vmul.f32 %v626, %v628
        %v632 = vperm.slane %v599, 0
        %v634 = vadd.f32 %v630, %v632
        %v635 = vpack.c.bf16 %v634, %v634
        %v636 = vld [vmem:[#allocation8] sm:$0xff]
        %v637 = vld [vmem:[#allocation8 + $0x8] sm:$0xf]
        %v638 = vld [vmem:[#allocation8 + $0xc] sm:$0xff]
        %v639 = vld [vmem:[#allocation8 + $0x14] sm:$0xf]
        %v640 = vld [vmem:[#allocation8 + $0x18] sm:$0xff]
        %v641 = vld [vmem:[#allocation8 + $0x20] sm:$0xf]
        %v642 = vld [vmem:[#allocation8 + $0x24] sm:$0xff]
        %v643 = vld [vmem:[#allocation8 + $0x2c] sm:$0xf]
        %v644 = vld [vmem:[#allocation8 + $0x30] sm:$0xff]
        %v645 = vld [vmem:[#allocation8 + $0x38] sm:$0xf]
        %v646 = vld [vmem:[#allocation8 + $0x3c] sm:$0xff]
        %v647 = vld [vmem:[#allocation8 + $0x44] sm:$0xf]
        %v648 = vld [vmem:[#allocation8 + $0x48] sm:$0xff]
        %v649 = vld [vmem:[#allocation8 + $0x50] sm:$0xf]
        %v650 = vld [vmem:[#allocation8 + $0x54] sm:$0xff]
        %v651 = vld [vmem:[#allocation8 + $0x5c] sm:$0xf]
        %v652 = vld [vmem:[#allocation8 + $0x60] sm:$0xff]
        %v653 = vld [vmem:[#allocation8 + $0x68] sm:$0xf]
        %v654 = vld [vmem:[#allocation8 + $0x6c] sm:$0xff]
        %v655 = vld [vmem:[#allocation8 + $0x74] sm:$0xf]
        %v656 = vld [vmem:[#allocation8 + $0x78] sm:$0xff]
        %v657 = vld [vmem:[#allocation8 + $0x80] sm:$0xf]
        %v658 = vld [vmem:[#allocation8 + $0x84] sm:$0xff]
        %v659 = vld [vmem:[#allocation8 + $0x8c] sm:$0xf]
        %v660 = vld [vmem:[#allocation8 + $0x90] sm:$0xff]
        %v661 = vld [vmem:[#allocation8 + $0x98] sm:$0xf]
        %v662 = vld [vmem:[#allocation8 + $0x9c] sm:$0xff]
        %v663 = vld [vmem:[#allocation8 + $0xa4] sm:$0xf]
        %v664 = vld [vmem:[#allocation8 + $0xa8] sm:$0xff]
        %v665 = vld [vmem:[#allocation8 + $0xb0] sm:$0xf]
        %v666 = vld [vmem:[#allocation8 + $0xb4] sm:$0xff]
        %v667 = vld [vmem:[#allocation8 + $0xbc] sm:$0xf]
        %v668 = vld [vmem:[%s4] sm:$0x7]
        %v670 = vperm.slane %v668, 0
        %v671 = vperm.slane %v668, 1
        %v672 = vperm.slane %v668, 2
        %v708 = vunpack.c.l.b16 %v636
        %v709 = vunpack.c.h.b16 %v636
        %v710 = vunpack.c.l.b16 %v637
        %v711 = vunpack.c.l.b16 %v638
        %v712 = vunpack.c.h.b16 %v638
        %v713 = vunpack.c.l.b16 %v639
        %v714 = vunpack.c.l.b16 %v640
        %v715 = vunpack.c.h.b16 %v640
        %v716 = vunpack.c.l.b16 %v641
        %v717 = vunpack.c.l.b16 %v642
        %v718 = vunpack.c.h.b16 %v642
        %v719 = vunpack.c.l.b16 %v643
        %v720 = vunpack.c.l.b16 %v644
        %v721 = vunpack.c.h.b16 %v644
        %v722 = vunpack.c.l.b16 %v645
        %v723 = vunpack.c.l.b16 %v646
        %v724 = vunpack.c.h.b16 %v646
        %v725 = vunpack.c.l.b16 %v647
        %v726 = vunpack.c.l.b16 %v648
        %v727 = vunpack.c.h.b16 %v648
        %v728 = vunpack.c.l.b16 %v649
        %v729 = vunpack.c.l.b16 %v650
        %v730 = vunpack.c.h.b16 %v650
        %v731 = vunpack.c.l.b16 %v651
        %v732 = vunpack.c.l.b16 %v652
        %v733 = vunpack.c.h.b16 %v652
        %v734 = vunpack.c.l.b16 %v653
        %v735 = vunpack.c.l.b16 %v654
        %v736 = vunpack.c.h.b16 %v654
        %v737 = vunpack.c.l.b16 %v655
        %v738 = vunpack.c.l.b16 %v656
        %v739 = vunpack.c.h.b16 %v656
        %v740 = vunpack.c.l.b16 %v657
        %v741 = vunpack.c.l.b16 %v658
        %v742 = vunpack.c.h.b16 %v658
        %v743 = vunpack.c.l.b16 %v659
        %v744 = vunpack.c.l.b16 %v660
        %v745 = vunpack.c.h.b16 %v660
        %v746 = vunpack.c.l.b16 %v661
        %v747 = vunpack.c.l.b16 %v662
        %v748 = vunpack.c.h.b16 %v662
        %v749 = vunpack.c.l.b16 %v663
        %v750 = vunpack.c.l.b16 %v664
        %v751 = vunpack.c.h.b16 %v664
        %v752 = vunpack.c.l.b16 %v665
        %v753 = vunpack.c.l.b16 %v666
        %v754 = vunpack.c.h.b16 %v666
        %v755 = vunpack.c.l.b16 %v667
        %v756 = vpack.c.b16 %v711, %v708
        %v757 = vpack.c.b16 %v712, %v709
        %v758 = vpack.c.b16 %v713, %v710
        %v759 = vpack.c.b16 %v717, %v714
        %v760 = vpack.c.b16 %v718, %v715
        %v761 = vpack.c.b16 %v719, %v716
        %v762 = vpack.c.b16 %v723, %v720
        %v763 = vpack.c.b16 %v724, %v721
        %v764 = vpack.c.b16 %v725, %v722
        %v765 = vpack.c.b16 %v729, %v726
        %v766 = vpack.c.b16 %v730, %v727
        %v767 = vpack.c.b16 %v731, %v728
        %v768 = vpack.c.b16 %v735, %v732
        %v769 = vpack.c.b16 %v736, %v733
        %v770 = vpack.c.b16 %v737, %v734
        %v771 = vpack.c.b16 %v741, %v738
        %v772 = vpack.c.b16 %v742, %v739
        %v773 = vpack.c.b16 %v743, %v740
        %v774 = vpack.c.b16 %v747, %v744
        %v775 = vpack.c.b16 %v748, %v745
        %v776 = vpack.c.b16 %v749, %v746
        %v777 = vpack.c.b16 %v753, %v750
        %v778 = vpack.c.b16 %v754, %v751
        %v779 = vpack.c.b16 %v755, %v752
        %804 = vmatpush.bf16.msra.mxu0 %v777
        %805 = vmatpush.bf16.msra.mxu0 %v774
        %806 = vmatpush.bf16.msra.mxu0 %v771
        %807 = vmatpush.bf16.msra.mxu0 %v768
        %808 = vmatpush.bf16.msra.mxu0 %v765
        %809 = vmatpush.bf16.msra.mxu0 %v762
        %810 = vmatpush.bf16.msra.mxu0 %v759
        %811 = vmatpush.bf16.msra.mxu0 %v756
        %812 = vmatmul.bf16.gmra.mxu0 %v635
        %v813 = vpop.f32.mrf.mxu0
        %v814 = vadd.f32 %v670, %v813
        %v815 = vpop.f32.mrf.mxu0
        %816 = vdwg.mxu0
        %817 = vmatpush.bf16.msra.mxu0 %v778
        %818 = vmatpush.bf16.msra.mxu0 %v775
        %819 = vmatpush.bf16.msra.mxu0 %v772
        %820 = vmatpush.bf16.msra.mxu0 %v769
        %821 = vmatpush.bf16.msra.mxu0 %v766
        %822 = vmatpush.bf16.msra.mxu0 %v763
        %823 = vmatpush.bf16.msra.mxu0 %v760
        %824 = vmatpush.bf16.msra.mxu0 %v757
        %825 = vmatmul.bf16.gmra.mxu0 %v635
        %v826 = vpop.f32.mrf.mxu0
        %v827 = vadd.f32 %v671, %v826
        %v828 = vpop.f32.mrf.mxu0
        %829 = vdwg.mxu0
        %830 = vmatpush.bf16.msra.mxu0 %v779
        %831 = vmatpush.bf16.msra.mxu0 %v776
        %832 = vmatpush.bf16.msra.mxu0 %v773
        %833 = vmatpush.bf16.msra.mxu0 %v770
        %834 = vmatpush.bf16.msra.mxu0 %v767
        %835 = vmatpush.bf16.msra.mxu0 %v764
        %836 = vmatpush.bf16.msra.mxu0 %v761
        %837 = vmatpush.bf16.msra.mxu0 %v758
        %838 = vmatmul.bf16.gmra.mxu0 %v635
        %v839 = vpop.f32.mrf.mxu0
        %v840 = vadd.f32 %v672, %v839
        %v841 = vpop.f32.mrf.mxu0
        %842 = vdwg.mxu0
        %vm843 = vcmask 261120
        %v845 = vsel %vm843, %v814, 0
        %v848 = vsel %vm843, %v827, 0
        %850 = vmatpush.xpose.msra.mxu0 0.0
        %851 = vmatpush.xpose.msra.mxu0 0.0
        %852 = vmatpush.xpose.msra.mxu0 0.0
        %853 = vmatpush.xpose.msra.mxu0 0.0
        %854 = vmatpush.xpose.msra.mxu0 0.0
        %855 = vmatpush.xpose.msra.mxu0 0.0
        %856 = vmatpush.xpose.msra.mxu0 0.0
        %857 = vmatpush.xpose.msra.mxu0 0.0
        %858 = vmatpush.xpose.msra.mxu0 0.0
        %859 = vmatpush.xpose.msra.mxu0 0.0
        %860 = vmatpush.xpose.msra.mxu0 0.0
        %861 = vmatpush.xpose.msra.mxu0 0.0
        %862 = vmatpush.xpose.msra.mxu0 0.0
        %863 = vmatpush.xpose.msra.mxu0 0.0
        %864 = vmatpush.xpose.msra.mxu0 0.0
        %865 = vmatpush.xpose.msra.mxu0 %v848
        %866 = vmatmul.f32.gmra.mxu0 %v845
        %v867 = vpop.f32.mrf.mxu0
        %v868 = vadd.f32 0.0, %v867
        %869 = vdwg.mxu0
        %v870 = vmul.f32 %v868, 0.17677669
        %vm871 = vcmask 64512
        %v872 = vsel %vm871, %v870, -inf
        %873 = vmax.xlane.f32.xlu0 %v872
        %v874 = vpop.xlane.xlu0 %873
        %v875 = vsub.f32 %v870, %v874
        %v876 = vmul.f32 %v875, 1.442695
        %v877 = vpow.pop %v876
        %v878 = vsel %vm871, %v877, 0.0
        %879 = vadd.xlane.f32.xlu0 %v878
        %v880 = vpop.xlane.xlu0 %879
        %v881 = vrcp.pop %v880
        %v882 = vmul.f32 %v880, %v881
        %v883 = vsub.f32 1.0, %v882
        %v884 = vmul.f32 %v881, %v883
        %v885 = vadd.f32 %v881, %v884
        %vm886 = vweird.f32 %v880
        %vm887 = vweird.f32 %v881
        %vm888 = vmor %vm886, %vm887
        %v889 = vsel %vm888, %v881, %v885
        %v890 = vand.u32 2147483647, %v880
        %vm891 = vcmp.eq.f32.partialorder %v890, 8.507059e+37
        %v892 = vand.u32 %v880, 2147483648
        %v893 = vor.u32 1.1754944e-38, %v892
        %v894 = vsel %vm891, %v893, %v889
        %v895 = vmul.f32 1.0, %v894
        %v896 = vmul.f32 %v877, %v895
        %v898 = vsel %vm871, %v896, 0
        %900 = vmatpush.msra.mxu0 0.0
        %901 = vmatpush.msra.mxu0 0.0
        %902 = vmatpush.msra.mxu0 0.0
        %903 = vmatpush.msra.mxu0 0.0
        %904 = vmatpush.msra.mxu0 0.0
        %905 = vmatpush.msra.mxu0 0.0
        %906 = vmatpush.msra.mxu0 0.0
        %907 = vmatpush.msra.mxu0 0.0
        %908 = vmatpush.msra.mxu0 0.0
        %909 = vmatpush.msra.mxu0 0.0
        %910 = vmatpush.msra.mxu0 0.0
        %911 = vmatpush.msra.mxu0 0.0
        %912 = vmatpush.msra.mxu0 0.0
        %913 = vmatpush.msra.mxu0 0.0
        %914 = vmatpush.msra.mxu0 0.0
        %915 = vmatpush.msra.mxu0 %v840
        %916 = vmatmul.f32.gmra.mxu0 %v898
        %v917 = vpop.f32.mrf.mxu0
        %v918 = vadd.f32 0.0, %v917
        %919 = vdwg.mxu0
        %920 = vrot.lane.b32.xlu0 %v814, 96
        %v921 = vpop.permute.xlu0 %920
        %922 = vrot.lane.b32.xlu0 %v827, 96
        %v923 = vpop.permute.xlu0 %922
        %v924 = vsel %vm843, %v921, 0
        %v926 = vsel %vm843, %v923, 0
        %928 = vmatpush.xpose.msra.mxu0 0.0
        %929 = vmatpush.xpose.msra.mxu0 0.0
        %930 = vmatpush.xpose.msra.mxu0 0.0
        %931 = vmatpush.xpose.msra.mxu0 0.0
        %932 = vmatpush.xpose.msra.mxu0 0.0
        %933 = vmatpush.xpose.msra.mxu0 0.0
        %934 = vmatpush.xpose.msra.mxu0 0.0
        %935 = vmatpush.xpose.msra.mxu0 0.0
        %936 = vmatpush.xpose.msra.mxu0 0.0
        %937 = vmatpush.xpose.msra.mxu0 0.0
        %938 = vmatpush.xpose.msra.mxu0 0.0
        %939 = vmatpush.xpose.msra.mxu0 0.0
        %940 = vmatpush.xpose.msra.mxu0 0.0
        %941 = vmatpush.xpose.msra.mxu0 0.0
        %942 = vmatpush.xpose.msra.mxu0 0.0
        %943 = vmatpush.xpose.msra.mxu0 %v926
        %944 = vmatmul.f32.gmra.mxu0 %v924
        %v945 = vpop.f32.mrf.mxu0
        %v946 = vadd.f32 0.0, %v945
        %947 = vdwg.mxu0
        %v948 = vmul.f32 %v946, 0.17677669
        %v949 = vsel %vm871, %v948, -inf
        %950 = vmax.xlane.f32.xlu0 %v949
        %v951 = vpop.xlane.xlu0 %950
        %v952 = vsub.f32 %v948, %v951
        %v953 = vmul.f32 %v952, 1.442695
        %v954 = vpow.pop %v953
        %v955 = vsel %vm871, %v954, 0.0
        %956 = vadd.xlane.f32.xlu0 %v955
        %v957 = vpop.xlane.xlu0 %956
        %v958 = vrcp.pop %v957
        %v959 = vmul.f32 %v957, %v958
        %v960 = vsub.f32 1.0, %v959
        %v961 = vmul.f32 %v958, %v960
        %v962 = vadd.f32 %v958, %v961
        %vm963 = vweird.f32 %v957
        %vm964 = vweird.f32 %v958
        %vm965 = vmor %vm963, %vm964
        %v966 = vsel %vm965, %v958, %v962
        %v967 = vand.u32 2147483647, %v957
        %vm968 = vcmp.eq.f32.partialorder %v967, 8.507059e+37
        %v969 = vand.u32 %v957, 2147483648
        %v970 = vor.u32 1.1754944e-38, %v969
        %v971 = vsel %vm968, %v970, %v966
        %v972 = vmul.f32 1.0, %v971
        %v973 = vmul.f32 %v954, %v972
        %975 = vrot.lane.b32.xlu0 %v840, 96
        %v976 = vpop.permute.xlu0 %975
        %v979 = vsel %vm871, %v973, 0
        %981 = vmatpush.msra.mxu0 0.0
        %982 = vmatpush.msra.mxu0 0.0
        %983 = vmatpush.msra.mxu0 0.0
        %984 = vmatpush.msra.mxu0 0.0
        %985 = vmatpush.msra.mxu0 0.0
        %986 = vmatpush.msra.mxu0 0.0
        %987 = vmatpush.msra.mxu0 0.0
        %988 = vmatpush.msra.mxu0 0.0
        %989 = vmatpush.msra.mxu0 0.0
        %990 = vmatpush.msra.mxu0 0.0
        %991 = vmatpush.msra.mxu0 0.0
        %992 = vmatpush.msra.mxu0 0.0
        %993 = vmatpush.msra.mxu0 0.0
        %994 = vmatpush.msra.mxu0 0.0
        %995 = vmatpush.msra.mxu0 0.0
        %996 = vmatpush.msra.mxu0 %v976
        %997 = vmatmul.f32.gmra.mxu0 %v979
        %v998 = vpop.f32.mrf.mxu0
        %v999 = vadd.f32 0.0, %v998
        %1000 = vdwg.mxu0
        %1001 = vrot.lane.b32.xlu0 %v814, 64
        %v1002 = vpop.permute.xlu0 %1001
        %1003 = vrot.lane.b32.xlu0 %v827, 64
        %v1004 = vpop.permute.xlu0 %1003
        %v1005 = vsel %vm843, %v1002, 0
        %v1007 = vsel %vm843, %v1004, 0
        %1009 = vmatpush.xpose.msra.mxu0 0.0
        %1010 = vmatpush.xpose.msra.mxu0 0.0
        %1011 = vmatpush.xpose.msra.mxu0 0.0
        %1012 = vmatpush.xpose.msra.mxu0 0.0
        %1013 = vmatpush.xpose.msra.mxu0 0.0
        %1014 = vmatpush.xpose.msra.mxu0 0.0
        %1015 = vmatpush.xpose.msra.mxu0 0.0
        %1016 = vmatpush.xpose.msra.mxu0 0.0
        %1017 = vmatpush.xpose.msra.mxu0 0.0
        %1018 = vmatpush.xpose.msra.mxu0 0.0
        %1019 = vmatpush.xpose.msra.mxu0 0.0
        %1020 = vmatpush.xpose.msra.mxu0 0.0
        %1021 = vmatpush.xpose.msra.mxu0 0.0
        %1022 = vmatpush.xpose.msra.mxu0 0.0
        %1023 = vmatpush.xpose.msra.mxu0 0.0
        %1024 = vmatpush.xpose.msra.mxu0 %v1007
        %1025 = vmatmul.f32.gmra.mxu0 %v1005
        %v1026 = vpop.f32.mrf.mxu0
        %v1027 = vadd.f32 0.0, %v1026
        %1028 = vdwg.mxu0
        %v1029 = vmul.f32 %v1027, 0.17677669
        %v1030 = vsel %vm871, %v1029, -inf
        %1031 = vmax.xlane.f32.xlu0 %v1030
        %v1032 = vpop.xlane.xlu0 %1031
        %v1033 = vsub.f32 %v1029, %v1032
        %v1034 = vmul.f32 %v1033, 1.442695
        %v1035 = vpow.pop %v1034
        %v1036 = vsel %vm871, %v1035, 0.0
        %1037 = vadd.xlane.f32.xlu0 %v1036
        %v1038 = vpop.xlane.xlu0 %1037
        %v1039 = vrcp.pop %v1038
        %v1040 = vmul.f32 %v1038, %v1039
        %v1041 = vsub.f32 1.0, %v1040
        %v1042 = vmul.f32 %v1039, %v1041
        %v1043 = vadd.f32 %v1039, %v1042
        %vm1044 = vweird.f32 %v1038
        %vm1045 = vweird.f32 %v1039
        %vm1046 = vmor %vm1044, %vm1045
        %v1047 = vsel %vm1046, %v1039, %v1043
        %v1048 = vand.u32 2147483647, %v1038
        %vm1049 = vcmp.eq.f32.partialorder %v1048, 8.507059e+37
        %v1050 = vand.u32 %v1038, 2147483648
        %v1051 = vor.u32 1.1754944e-38, %v1050
        %v1052 = vsel %vm1049, %v1051, %v1047
        %v1053 = vmul.f32 1.0, %v1052
        %v1054 = vmul.f32 %v1035, %v1053
        %1055 = vrot.lane.b32.xlu0 %v840, 64
        %v1056 = vpop.permute.xlu0 %1055
        %v1059 = vsel %vm871, %v1054, 0
        %1061 = vmatpush.msra.mxu0 0.0
        %1062 = vmatpush.msra.mxu0 0.0
        %1063 = vmatpush.msra.mxu0 0.0
        %1064 = vmatpush.msra.mxu0 0.0
        %1065 = vmatpush.msra.mxu0 0.0
        %1066 = vmatpush.msra.mxu0 0.0
        %1067 = vmatpush.msra.mxu0 0.0
        %1068 = vmatpush.msra.mxu0 0.0
        %1069 = vmatpush.msra.mxu0 0.0
        %1070 = vmatpush.msra.mxu0 0.0
        %1071 = vmatpush.msra.mxu0 0.0
        %1072 = vmatpush.msra.mxu0 0.0
        %1073 = vmatpush.msra.mxu0 0.0
        %1074 = vmatpush.msra.mxu0 0.0
        %1075 = vmatpush.msra.mxu0 0.0
        %1076 = vmatpush.msra.mxu0 %v1056
        %1077 = vmatmul.f32.gmra.mxu0 %v1059
        %v1078 = vpop.f32.mrf.mxu0
        %v1079 = vadd.f32 0.0, %v1078
        %1080 = vdwg.mxu0
        %1081 = vrot.lane.b32.xlu0 %v814, 32
        %v1082 = vpop.permute.xlu0 %1081
        %1083 = vrot.lane.b32.xlu0 %v827, 32
        %v1084 = vpop.permute.xlu0 %1083
        %v1085 = vsel %vm843, %v1082, 0
        %v1087 = vsel %vm843, %v1084, 0
        %1089 = vmatpush.xpose.msra.mxu0 0.0
        %1090 = vmatpush.xpose.msra.mxu0 0.0
        %1091 = vmatpush.xpose.msra.mxu0 0.0
        %1092 = vmatpush.xpose.msra.mxu0 0.0
        %1093 = vmatpush.xpose.msra.mxu0 0.0
        %1094 = vmatpush.xpose.msra.mxu0 0.0
        %1095 = vmatpush.xpose.msra.mxu0 0.0
        %1096 = vmatpush.xpose.msra.mxu0 0.0
        %1097 = vmatpush.xpose.msra.mxu0 0.0
        %1098 = vmatpush.xpose.msra.mxu0 0.0
        %1099 = vmatpush.xpose.msra.mxu0 0.0
        %1100 = vmatpush.xpose.msra.mxu0 0.0
        %1101 = vmatpush.xpose.msra.mxu0 0.0
        %1102 = vmatpush.xpose.msra.mxu0 0.0
        %1103 = vmatpush.xpose.msra.mxu0 0.0
        %1104 = vmatpush.xpose.msra.mxu0 %v1087
        %1105 = vmatmul.f32.gmra.mxu0 %v1085
        %v1106 = vpop.f32.mrf.mxu0
        %v1107 = vadd.f32 0.0, %v1106
        %1108 = vdwg.mxu0
        %v1109 = vmul.f32 %v1107, 0.17677669
        %v1110 = vsel %vm871, %v1109, -inf
        %1111 = vmax.xlane.f32.xlu0 %v1110
        %v1112 = vpop.xlane.xlu0 %1111
        %v1113 = vsub.f32 %v1109, %v1112
        %v1114 = vmul.f32 %v1113, 1.442695
        %v1115 = vpow.pop %v1114
        %v1116 = vsel %vm871, %v1115, 0.0
        %1117 = vadd.xlane.f32.xlu0 %v1116
        %v1118 = vpop.xlane.xlu0 %1117
        %v1119 = vrcp.pop %v1118
        %v1120 = vmul.f32 %v1118, %v1119
        %v1121 = vsub.f32 1.0, %v1120
        %v1122 = vmul.f32 %v1119, %v1121
        %v1123 = vadd.f32 %v1119, %v1122
        %vm1124 = vweird.f32 %v1118
        %vm1125 = vweird.f32 %v1119
        %vm1126 = vmor %vm1124, %vm1125
        %v1127 = vsel %vm1126, %v1119, %v1123
        %v1128 = vand.u32 2147483647, %v1118
        %vm1129 = vcmp.eq.f32.partialorder %v1128, 8.507059e+37
        %v1130 = vand.u32 %v1118, 2147483648
        %v1131 = vor.u32 1.1754944e-38, %v1130
        %v1132 = vsel %vm1129, %v1131, %v1127
        %v1133 = vmul.f32 1.0, %v1132
        %v1134 = vmul.f32 %v1115, %v1133
        %1135 = vrot.lane.b32.xlu0 %v840, 32
        %v1136 = vpop.permute.xlu0 %1135
        %v1139 = vsel %vm871, %v1134, 0
        %1141 = vmatpush.msra.mxu0 0.0
        %1142 = vmatpush.msra.mxu0 0.0
        %1143 = vmatpush.msra.mxu0 0.0
        %1144 = vmatpush.msra.mxu0 0.0
        %1145 = vmatpush.msra.mxu0 0.0
        %1146 = vmatpush.msra.mxu0 0.0
        %1147 = vmatpush.msra.mxu0 0.0
        %1148 = vmatpush.msra.mxu0 0.0
        %1149 = vmatpush.msra.mxu0 0.0
        %1150 = vmatpush.msra.mxu0 0.0
        %1151 = vmatpush.msra.mxu0 0.0
        %1152 = vmatpush.msra.mxu0 0.0
        %1153 = vmatpush.msra.mxu0 0.0
        %1154 = vmatpush.msra.mxu0 0.0
        %1155 = vmatpush.msra.mxu0 0.0
        %1156 = vmatpush.msra.mxu0 %v1136
        %1157 = vmatmul.f32.gmra.mxu0 %v1139
        %v1158 = vpop.f32.mrf.mxu0
        %v1159 = vadd.f32 0.0, %v1158
        %1160 = vdwg.mxu0
        %1162 = vrot.lane.b32.xlu0 %v999, 32
        %v1163 = vpop.permute.xlu0 %1162
        %1166 = vrot.lane.b32.xlu0 %v1079, 64
        %v1167 = vpop.permute.xlu0 %1166
        %1170 = vrot.lane.b32.xlu0 %v1159, 96
        %v1171 = vpop.permute.xlu0 %1170
        %v1173 = vsel %vm843, %v918, %v1163
        %vm1174 = vcmask 523264
        %v1175 = vsel %vm1174, %v1173, %v1167
        %vm1176 = vcmask 785408
        %v1177 = vsel %vm1176, %v1175, %v1171
        %v1178 = vpack.c.bf16 %v1177, %v1177
        %v1179 = vld [vmem:[#allocation10] sm:$0xf]
        %v1180 = vld [vmem:[#allocation10 + $0x4] sm:$0xf]
        %v1181 = vld [vmem:[#allocation10 + $0x8] sm:$0xf]
        %v1182 = vld [vmem:[#allocation10 + $0xc] sm:$0xf]
        %v1183 = vld [vmem:[#allocation10 + $0x10] sm:$0xf]
        %v1184 = vld [vmem:[#allocation10 + $0x14] sm:$0xf]
        %v1185 = vld [vmem:[#allocation10 + $0x18] sm:$0xf]
        %v1186 = vld [vmem:[#allocation10 + $0x1c] sm:$0xf]
        %v1187 = vld [vmem:[#allocation10 + $0x20] sm:$0xf]
        %v1188 = vld [vmem:[#allocation10 + $0x24] sm:$0xf]
        %v1189 = vld [vmem:[#allocation10 + $0x28] sm:$0xf]
        %v1190 = vld [vmem:[#allocation10 + $0x2c] sm:$0xf]
        %v1191 = vld [vmem:[#allocation10 + $0x30] sm:$0xf]
        %v1192 = vld [vmem:[#allocation10 + $0x34] sm:$0xf]
        %v1193 = vld [vmem:[#allocation10 + $0x38] sm:$0xf]
        %v1194 = vld [vmem:[#allocation10 + $0x3c] sm:$0xf]
        %v1195 = vld [vmem:[#allocation11] sm:$0x1]
        %v1197 = vperm.slane %v1195, 0
        %v1215 = vunpack.c.l.b16 %v1179
        %v1216 = vunpack.c.l.b16 %v1180
        %v1217 = vunpack.c.l.b16 %v1181
        %v1218 = vunpack.c.l.b16 %v1182
        %v1219 = vunpack.c.l.b16 %v1183
        %v1220 = vunpack.c.l.b16 %v1184
        %v1221 = vunpack.c.l.b16 %v1185
        %v1222 = vunpack.c.l.b16 %v1186
        %v1223 = vunpack.c.l.b16 %v1187
        %v1224 = vunpack.c.l.b16 %v1188
        %v1225 = vunpack.c.l.b16 %v1189
        %v1226 = vunpack.c.l.b16 %v1190
        %v1227 = vunpack.c.l.b16 %v1191
        %v1228 = vunpack.c.l.b16 %v1192
        %v1229 = vunpack.c.l.b16 %v1193
        %v1230 = vunpack.c.l.b16 %v1194
        %v1231 = vpack.c.b16 %v1216, %v1215
        %v1232 = vpack.c.b16 %v1218, %v1217
        %v1233 = vpack.c.b16 %v1220, %v1219
        %v1234 = vpack.c.b16 %v1222, %v1221
        %v1235 = vpack.c.b16 %v1224, %v1223
        %v1236 = vpack.c.b16 %v1226, %v1225
        %v1237 = vpack.c.b16 %v1228, %v1227
        %v1238 = vpack.c.b16 %v1230, %v1229
        %1247 = vmatpush.bf16.msra.mxu0 %v1238
        %1248 = vmatpush.bf16.msra.mxu0 %v1237
        %1249 = vmatpush.bf16.msra.mxu0 %v1236
        %1250 = vmatpush.bf16.msra.mxu0 %v1235
        %1251 = vmatpush.bf16.msra.mxu0 %v1234
        %1252 = vmatpush.bf16.msra.mxu0 %v1233
        %1253 = vmatpush.bf16.msra.mxu0 %v1232
        %1254 = vmatpush.bf16.msra.mxu0 %v1231
        %1255 = vmatmul.bf16.gmra.mxu0 %v1178
        %v1256 = vpop.f32.mrf.mxu0
        %v1257 = vadd.f32 %v1197, %v1256
        %v1258 = vpop.f32.mrf.mxu0
        %1259 = vdwg.mxu0
        %v1260 = vadd.f32 %v597, %v1257
        %v1261 = vld [vmem:[#allocation13] sm:$0x1]
        %v1262 = vld [vmem:[#allocation14] sm:$0x1]
        %1263 = vadd.xlane.f32.xlu0 %v1260
        %v1264 = vpop.xlane.xlu0 %1263
        %v1265 = vmul.f32 %v1264, %v608
        %v1266 = vsub.f32 %v1260, %v1265
        %v1267 = vmul.f32 %v1266, %v1266
        %1268 = vadd.xlane.f32.xlu0 %v1267
        %v1269 = vpop.xlane.xlu0 %1268
        %v1270 = vmul.f32 %v1269, %v608
        %v1271 = vadd.f32 %v1270, 1e-05
        %v1272 = vrsqrt.pop %v1271
        %v1273 = vmul.f32 %v1272, %v1271
        %v1274 = vmul.f32 %v1273, %v1272
        %v1275 = vmul.f32 0.5, %v1274
        %v1276 = vsub.f32 1.5, %v1275
        %v1277 = vmul.f32 %v1272, %v1276
        %vm1278 = vweird.f32 %v1271
        %vm1279 = vweird.f32 %v1272
        %vm1280 = vmor %vm1278, %vm1279
        %v1281 = vsel %vm1280, %v1272, %v1277
        %v1282 = vmul.f32 %v1266, %v1281
        %v1284 = vperm.slane %v1261, 0
        %v1286 = vmul.f32 %v1282, %v1284
        %v1288 = vperm.slane %v1262, 0
        %v1290 = vadd.f32 %v1286, %v1288
        %v1291 = vpack.c.bf16 %v1290, %v1290
        %v1292 = vld [vmem:[#allocation16] sm:$0xff]
        %v1293 = vld [vmem:[#allocation16 + $0x8] sm:$0xff]
        %v1294 = vld [vmem:[#allocation16 + $0x10] sm:$0xff]
        %v1295 = vld [vmem:[#allocation16 + $0x18] sm:$0xff]
        %v1296 = vld [vmem:[#allocation16 + $0x20] sm:$0xff]
        %v1297 = vld [vmem:[#allocation16 + $0x28] sm:$0xff]
        %v1298 = vld [vmem:[#allocation16 + $0x30] sm:$0xff]
        %v1299 = vld [vmem:[#allocation16 + $0x38] sm:$0xff]
        %v1300 = vld [vmem:[#allocation16 + $0x40] sm:$0xff]
        %v1301 = vld [vmem:[#allocation16 + $0x48] sm:$0xff]
        %v1302 = vld [vmem:[#allocation16 + $0x50] sm:$0xff]
        %v1303 = vld [vmem:[#allocation16 + $0x58] sm:$0xff]
        %v1304 = vld [vmem:[#allocation16 + $0x60] sm:$0xff]
        %v1305 = vld [vmem:[#allocation16 + $0x68] sm:$0xff]
        %v1306 = vld [vmem:[#allocation16 + $0x70] sm:$0xff]
        %v1307 = vld [vmem:[#allocation16 + $0x78] sm:$0xff]
        %v1308 = vld [vmem:[#allocation16 + $0x80] sm:$0xff]
        %v1309 = vld [vmem:[#allocation16 + $0x88] sm:$0xff]
        %v1310 = vld [vmem:[#allocation16 + $0x90] sm:$0xff]
        %v1311 = vld [vmem:[#allocation16 + $0x98] sm:$0xff]
        %v1312 = vld [vmem:[#allocation16 + $0xa0] sm:$0xff]
        %v1313 = vld [vmem:[#allocation16 + $0xa8] sm:$0xff]
        %v1314 = vld [vmem:[#allocation16 + $0xb0] sm:$0xff]
        %v1315 = vld [vmem:[#allocation16 + $0xb8] sm:$0xff]
        %v1316 = vld [vmem:[#allocation16 + $0xc0] sm:$0xff]
        %v1317 = vld [vmem:[#allocation16 + $0xc8] sm:$0xff]
        %v1318 = vld [vmem:[#allocation16 + $0xd0] sm:$0xff]
        %v1319 = vld [vmem:[#allocation16 + $0xd8] sm:$0xff]
        %v1320 = vld [vmem:[#allocation16 + $0xe0] sm:$0xff]
        %v1321 = vld [vmem:[#allocation16 + $0xe8] sm:$0xff]
        %v1322 = vld [vmem:[#allocation16 + $0xf0] sm:$0xff]
        %v1323 = vld [vmem:[#allocation16 + $0xf8] sm:$0xff]
        %v1324 = vld [vmem:[%s10] sm:$0xf]
        %v1326 = vperm.slane %v1324, 0
        %v1327 = vperm.slane %v1324, 1
        %v1328 = vperm.slane %v1324, 2
        %v1329 = vperm.slane %v1324, 3
        %v1366 = vunpack.c.l.b16 %v1292
        %v1367 = vunpack.c.h.b16 %v1292
        %v1368 = vunpack.c.l.b16 %v1293
        %v1369 = vunpack.c.h.b16 %v1293
        %v1370 = vunpack.c.l.b16 %v1294
        %v1371 = vunpack.c.h.b16 %v1294
        %v1372 = vunpack.c.l.b16 %v1295
        %v1373 = vunpack.c.h.b16 %v1295
        %v1374 = vunpack.c.l.b16 %v1296
        %v1375 = vunpack.c.h.b16 %v1296
        %v1376 = vunpack.c.l.b16 %v1297
        %v1377 = vunpack.c.h.b16 %v1297
        %v1378 = vunpack.c.l.b16 %v1298
        %v1379 = vunpack.c.h.b16 %v1298
        %v1380 = vunpack.c.l.b16 %v1299
        %v1381 = vunpack.c.h.b16 %v1299
        %v1382 = vunpack.c.l.b16 %v1300
        %v1383 = vunpack.c.h.b16 %v1300
        %v1384 = vunpack.c.l.b16 %v1301
        %v1385 = vunpack.c.h.b16 %v1301
        %v1386 = vunpack.c.l.b16 %v1302
        %v1387 = vunpack.c.h.b16 %v1302
        %v1388 = vunpack.c.l.b16 %v1303
        %v1389 = vunpack.c.h.b16 %v1303
        %v1390 = vunpack.c.l.b16 %v1304
        %v1391 = vunpack.c.h.b16 %v1304
        %v1392 = vunpack.c.l.b16 %v1305
        %v1393 = vunpack.c.h.b16 %v1305
        %v1394 = vunpack.c.l.b16 %v1306
        %v1395 = vunpack.c.h.b16 %v1306
        %v1396 = vunpack.c.l.b16 %v1307
        %v1397 = vunpack.c.h.b16 %v1307
        %v1398 = vunpack.c.l.b16 %v1308
        %v1399 = vunpack.c.h.b16 %v1308
        %v1400 = vunpack.c.l.b16 %v1309
        %v1401 = vunpack.c.h.b16 %v1309
        %v1402 = vunpack.c.l.b16 %v1310
        %v1403 = vunpack.c.h.b16 %v1310
        %v1404 = vunpack.c.l.b16 %v1311
        %v1405 = vunpack.c.h.b16 %v1311
        %v1406 = vunpack.c.l.b16 %v1312
        %v1407 = vunpack.c.h.b16 %v1312
        %v1408 = vunpack.c.l.b16 %v1313
        %v1409 = vunpack.c.h.b16 %v1313
        %v1410 = vunpack.c.l.b16 %v1314
        %v1411 = vunpack.c.h.b16 %v1314
        %v1412 = vunpack.c.l.b16 %v1315
        %v1413 = vunpack.c.h.b16 %v1315
        %v1414 = vunpack.c.l.b16 %v1316
        %v1415 = vunpack.c.h.b16 %v1316
        %v1416 = vunpack.c.l.b16 %v1317
        %v1417 = vunpack.c.h.b16 %v1317
        %v1418 = vunpack.c.l.b16 %v1318
        %v1419 = vunpack.c.h.b16 %v1318
        %v1420 = vunpack.c.l.b16 %v1319
        %v1421 = vunpack.c.h.b16 %v1319
        %v1422 = vunpack.c.l.b16 %v1320
        %v1423 = vunpack.c.h.b16 %v1320
        %v1424 = vunpack.c.l.b16 %v1321
        %v1425 = vunpack.c.h.b16 %v1321
        %v1426 = vunpack.c.l.b16 %v1322
        %v1427 = vunpack.c.h.b16 %v1322
        %v1428 = vunpack.c.l.b16 %v1323
        %v1429 = vunpack.c.h.b16 %v1323
        %v1430 = vpack.c.b16 %v1370, %v1366
        %v1431 = vpack.c.b16 %v1371, %v1367
        %v1432 = vpack.c.b16 %v1372, %v1368
        %v1433 = vpack.c.b16 %v1373, %v1369
        %v1434 = vpack.c.b16 %v1378, %v1374
        %v1435 = vpack.c.b16 %v1379, %v1375
        %v1436 = vpack.c.b16 %v1380, %v1376
        %v1437 = vpack.c.b16 %v1381, %v1377
        %v1438 = vpack.c.b16 %v1386, %v1382
        %v1439 = vpack.c.b16 %v1387, %v1383
        %v1440 = vpack.c.b16 %v1388, %v1384
        %v1441 = vpack.c.b16 %v1389, %v1385
        %v1442 = vpack.c.b16 %v1394, %v1390
        %v1443 = vpack.c.b16 %v1395, %v1391
        %v1444 = vpack.c.b16 %v1396, %v1392
        %v1445 = vpack.c.b16 %v1397, %v1393
        %v1446 = vpack.c.b16 %v1402, %v1398
        %v1447 = vpack.c.b16 %v1403, %v1399
        %v1448 = vpack.c.b16 %v1404, %v1400
        %v1449 = vpack.c.b16 %v1405, %v1401
        %v1450 = vpack.c.b16 %v1410, %v1406
        %v1451 = vpack.c.b16 %v1411, %v1407
        %v1452 = vpack.c.b16 %v1412, %v1408
        %v1453 = vpack.c.b16 %v1413, %v1409
        %v1454 = vpack.c.b16 %v1418, %v1414
        %v1455 = vpack.c.b16 %v1419, %v1415
        %v1456 = vpack.c.b16 %v1420, %v1416
        %v1457 = vpack.c.b16 %v1421, %v1417
        %v1458 = vpack.c.b16 %v1426, %v1422
        %v1459 = vpack.c.b16 %v1427, %v1423
        %v1460 = vpack.c.b16 %v1428, %v1424
        %v1461 = vpack.c.b16 %v1429, %v1425
        %1494 = vmatpush.bf16.msra.mxu0 %v1458
        %1495 = vmatpush.bf16.msra.mxu0 %v1454
        %1496 = vmatpush.bf16.msra.mxu0 %v1450
        %1497 = vmatpush.bf16.msra.mxu0 %v1446
        %1498 = vmatpush.bf16.msra.mxu0 %v1442
        %1499 = vmatpush.bf16.msra.mxu0 %v1438
        %1500 = vmatpush.bf16.msra.mxu0 %v1434
        %1501 = vmatpush.bf16.msra.mxu0 %v1430
        %1502 = vmatmul.bf16.gmra.mxu0 %v1291
        %v1503 = vpop.f32.mrf.mxu0
        %v1504 = vadd.f32 %v1326, %v1503
        %v1505 = vpop.f32.mrf.mxu0
        %1506 = vdwg.mxu0
        %1507 = vmatpush.bf16.msra.mxu0 %v1459
        %1508 = vmatpush.bf16.msra.mxu0 %v1455
        %1509 = vmatpush.bf16.msra.mxu0 %v1451
        %1510 = vmatpush.bf16.msra.mxu0 %v1447
        %1511 = vmatpush.bf16.msra.mxu0 %v1443
        %1512 = vmatpush.bf16.msra.mxu0 %v1439
        %1513 = vmatpush.bf16.msra.mxu0 %v1435
        %1514 = vmatpush.bf16.msra.mxu0 %v1431
        %1515 = vmatmul.bf16.gmra.mxu0 %v1291
        %v1516 = vpop.f32.mrf.mxu0
        %v1517 = vadd.f32 %v1327, %v1516
        %v1518 = vpop.f32.mrf.mxu0
        %1519 = vdwg.mxu0
        %1520 = vmatpush.bf16.msra.mxu0 %v1460
        %1521 = vmatpush.bf16.msra.mxu0 %v1456
        %1522 = vmatpush.bf16.msra.mxu0 %v1452
        %1523 = vmatpush.bf16.msra.mxu0 %v1448
        %1524 = vmatpush.bf16.msra.mxu0 %v1444
        %1525 = vmatpush.bf16.msra.mxu0 %v1440
        %1526 = vmatpush.bf16.msra.mxu0 %v1436
        %1527 = vmatpush.bf16.msra.mxu0 %v1432
        %1528 = vmatmul.bf16.gmra.mxu0 %v1291
        %v1529 = vpop.f32.mrf.mxu0
        %v1530 = vadd.f32 %v1328, %v1529
        %v1531 = vpop.f32.mrf.mxu0
        %1532 = vdwg.mxu0
        %1533 = vmatpush.bf16.msra.mxu0 %v1461
        %1534 = vmatpush.bf16.msra.mxu0 %v1457
        %1535 = vmatpush.bf16.msra.mxu0 %v1453
        %1536 = vmatpush.bf16.msra.mxu0 %v1449
        %1537 = vmatpush.bf16.msra.mxu0 %v1445
        %1538 = vmatpush.bf16.msra.mxu0 %v1441
        %1539 = vmatpush.bf16.msra.mxu0 %v1437
        %1540 = vmatpush.bf16.msra.mxu0 %v1433
        %1541 = vmatmul.bf16.gmra.mxu0 %v1291
        %v1542 = vpop.f32.mrf.mxu0
        %v1543 = vadd.f32 %v1329, %v1542
        %v1544 = vpop.f32.mrf.mxu0
        %1545 = vdwg.mxu0
        %v1546 = vmul.f32 %v1504, 0.5
        %v1547 = vmul.f32 %v1517, 0.5
        %v1548 = vmul.f32 %v1530, 0.5
        %v1549 = vmul.f32 %v1543, 0.5
        %v1550 = vmul.f32 %v1504, 0.70710677
        %v1551 = vmul.f32 %v1517, 0.70710677
        %v1552 = vmul.f32 %v1530, 0.70710677
        %v1553 = vmul.f32 %v1543, 0.70710677
        %v1554 = vand.u32 2147483647, %v1550
        %v1555 = vand.u32 2147483647, %v1551
        %v1556 = vand.u32 2147483647, %v1552
        %v1557 = vand.u32 2147483647, %v1553
        %v1558 = vmul.f32 %v1554, 0.3275911
        %v1559 = vmul.f32 %v1555, 0.3275911
        %v1560 = vmul.f32 %v1556, 0.3275911
        %v1561 = vmul.f32 %v1557, 0.3275911
        %v1562 = vadd.f32 %v1558, 1.0
        %v1563 = vadd.f32 %v1559, 1.0
        %v1564 = vadd.f32 %v1560, 1.0
        %v1565 = vadd.f32 %v1561, 1.0
        %v1566 = vrcp.pop %v1562
        %v1567 = vmul.f32 %v1562, %v1566
        %v1568 = vsub.f32 1.0, %v1567
        %v1569 = vmul.f32 %v1566, %v1568
        %v1570 = vadd.f32 %v1566, %v1569
        %vm1571 = vweird.f32 %v1562
        %vm1572 = vweird.f32 %v1566
        %vm1573 = vmor %vm1571, %vm1572
        %v1574 = vsel %vm1573, %v1566, %v1570
        %v1575 = vand.u32 2147483647, %v1562
        %vm1576 = vcmp.eq.f32.partialorder %v1575, 8.507059e+37
        %v1577 = vand.u32 %v1562, 2147483648
        %v1578 = vor.u32 1.1754944e-38, %v1577
        %v1579 = vsel %vm1576, %v1578, %v1574
        %v1580 = vmul.f32 1.0, %v1579
        %v1581 = vrcp.pop %v1563
        %v1582 = vmul.f32 %v1563, %v1581
        %v1583 = vsub.f32 1.0, %v1582
        %v1584 = vmul.f32 %v1581, %v1583
        %v1585 = vadd.f32 %v1581, %v1584
        %vm1586 = vweird.f32 %v1563
        %vm1587 = vweird.f32 %v1581
        %vm1588 = vmor %vm1586, %vm1587
        %v1589 = vsel %vm1588, %v1581, %v1585
        %v1590 = vand.u32 2147483647, %v1563
        %vm1591 = vcmp.eq.f32.partialorder %v1590, 8.507059e+37
        %v1592 = vand.u32 %v1563, 2147483648
        %v1593 = vor.u32 1.1754944e-38, %v1592
        %v1594 = vsel %vm1591, %v1593, %v1589
        %v1595 = vmul.f32 1.0, %v1594
        %v1596 = vrcp.pop %v1564
        %v1597 = vmul.f32 %v1564, %v1596
        %v1598 = vsub.f32 1.0, %v1597
        %v1599 = vmul.f32 %v1596, %v1598
        %v1600 = vadd.f32 %v1596, %v1599
        %vm1601 = vweird.f32 %v1564
        %vm1602 = vweird.f32 %v1596
        %vm1603 = vmor %vm1601, %vm1602
        %v1604 = vsel %vm1603, %v1596, %v1600
        %v1605 = vand.u32 2147483647, %v1564
        %vm1606 = vcmp.eq.f32.partialorder %v1605, 8.507059e+37
        %v1607 = vand.u32 %v1564, 2147483648
        %v1608 = vor.u32 1.1754944e-38, %v1607
        %v1609 = vsel %vm1606, %v1608, %v1604
        %v1610 = vmul.f32 1.0, %v1609
        %v1611 = vrcp.pop %v1565
        %v1612 = vmul.f32 %v1565, %v1611
        %v1613 = vsub.f32 1.0, %v1612
        %v1614 = vmul.f32 %v1611, %v1613
        %v1615 = vadd.f32 %v1611, %v1614
        %vm1616 = vweird.f32 %v1565
        %vm1617 = vweird.f32 %v1611
        %vm1618 = vmor %vm1616, %vm1617
        %v1619 = vsel %vm1618, %v1611, %v1615
        %v1620 = vand.u32 2147483647, %v1565
        %vm1621 = vcmp.eq.f32.partialorder %v1620, 8.507059e+37
        %v1622 = vand.u32 %v1565, 2147483648
        %v1623 = vor.u32 1.1754944e-38, %v1622
        %v1624 = vsel %vm1621, %v1623, %v1619
        %v1625 = vmul.f32 1.0, %v1624
        %v1626 = vmul.f32 %v1580, 1.0614054
        %v1627 = vmul.f32 %v1595, 1.0614054
        %v1628 = vmul.f32 %v1610, 1.0614054
        %v1629 = vmul.f32 %v1625, 1.0614054
        %v1630 = vadd.f32 %v1626, -1.4531521
        %v1631 = vadd.f32 %v1627, -1.4531521
        %v1632 = vadd.f32 %v1628, -1.4531521
        %v1633 = vadd.f32 %v1629, -1.4531521
        %v1634 = vmul.f32 %v1580, %v1630
        %v1635 = vmul.f32 %v1595, %v1631
        %v1636 = vmul.f32 %v1610, %v1632
        %v1637 = vmul.f32 %v1625, %v1633
        %v1638 = vadd.f32 %v1634, 1.4214138
        %v1639 = vadd.f32 %v1635, 1.4214138
        %v1640 = vadd.f32 %v1636, 1.4214138
        %v1641 = vadd.f32 %v1637, 1.4214138
        %v1642 = vmul.f32 %v1580, %v1638
        %v1643 = vmul.f32 %v1595, %v1639
        %v1644 = vmul.f32 %v1610, %v1640
        %v1645 = vmul.f32 %v1625, %v1641
        %v1646 = vadd.f32 %v1642, -0.28449672
        %v1647 = vadd.f32 %v1643, -0.28449672
        %v1648 = vadd.f32 %v1644, -0.28449672
        %v1649 = vadd.f32 %v1645, -0.28449672
        %v1650 = vmul.f32 %v1580, %v1646
        %v1651 = vmul.f32 %v1595, %v1647
        %v1652 = vmul.f32 %v1610, %v1648
        %v1653 = vmul.f32 %v1625, %v1649
        %v1654 = vadd.f32 %v1650, 0.2548296
        %v1655 = vadd.f32 %v1651, 0.2548296
        %v1656 = vadd.f32 %v1652, 0.2548296
        %v1657 = vadd.f32 %v1653, 0.2548296
        %v1658 = vmul.f32 %v1580, %v1654
        %v1659 = vmul.f32 %v1595, %v1655
        %v1660 = vmul.f32 %v1610, %v1656
        %v1661 = vmul.f32 %v1625, %v1657
        %v1662 = vsub.f32 0.0, %v1554
        %v1663 = vsub.f32 0.0, %v1555
        %v1664 = vsub.f32 0.0, %v1556
        %v1665 = vsub.f32 0.0, %v1557
        %v1666 = vmul.f32 %v1662, %v1554
        %v1667 = vmul.f32 %v1663, %v1555
        %v1668 = vmul.f32 %v1664, %v1556
        %v1669 = vmul.f32 %v1665, %v1557
        %v1670 = vmul.f32 %v1666, 1.442695
        %v1671 = vpow.pop %v1670
        %v1672 = vmul.f32 %v1667, 1.442695
        %v1673 = vpow.pop %v1672
        %v1674 = vmul.f32 %v1668, 1.442695
        %v1675 = vpow.pop %v1674
        %v1676 = vmul.f32 %v1669, 1.442695
        %v1677 = vpow.pop %v1676
        %v1678 = vmul.f32 %v1658, %v1671
        %v1679 = vmul.f32 %v1659, %v1673
        %v1680 = vmul.f32 %v1660, %v1675
        %v1681 = vmul.f32 %v1661, %v1677
        %v1682 = vsub.f32 1.0, %v1678
        %v1683 = vsub.f32 1.0, %v1679
        %v1684 = vsub.f32 1.0, %v1680
        %v1685 = vsub.f32 1.0, %v1681
        %vm1686 = vcmp.ge.f32.partialorder %v1550, 0.0
        %vm1687 = vcmp.ge.f32.partialorder %v1551, 0.0
        %vm1688 = vcmp.ge.f32.partialorder %v1552, 0.0
        %vm1689 = vcmp.ge.f32.partialorder %v1553, 0.0
        %v1690 = vsub.f32 0.0, %v1682
        %v1691 = vsub.f32 0.0, %v1683
        %v1692 = vsub.f32 0.0, %v1684
        %v1693 = vsub.f32 0.0, %v1685
        %v1694 = vsel %vm1686, %v1682, %v1690
        %v1695 = vsel %vm1687, %v1683, %v1691
        %v1696 = vsel %vm1688, %v1684, %v1692
        %v1697 = vsel %vm1689, %v1685, %v1693
        %v1698 = vadd.f32 %v1694, 1.0
        %v1699 = vadd.f32 %v1695, 1.0
        %v1700 = vadd.f32 %v1696, 1.0
        %v1701 = vadd.f32 %v1697, 1.0
        %v1702 = vmul.f32 %v1546, %v1698
        %v1703 = vmul.f32 %v1547, %v1699
        %v1704 = vmul.f32 %v1548, %v1700
        %v1705 = vmul.f32 %v1549, %v1701
        %v1706 = vpack.c.bf16 %v1702, %v1702
        %v1707 = vpack.c.bf16 %v1703, %v1703
        %v1708 = vpack.c.bf16 %v1704, %v1704
        %v1709 = vpack.c.bf16 %v1705, %v1705
        %v1710 = vld [vmem:[#allocation17] sm:$0xf]
        %v1711 = vld [vmem:[#allocation17 + $0x4] sm:$0xf]
        %v1712 = vld [vmem:[#allocation17 + $0x8] sm:$0xf]
        %v1713 = vld [vmem:[#allocation17 + $0xc] sm:$0xf]
        %v1714 = vld [vmem:[#allocation17 + $0x10] sm:$0xf]
        %v1715 = vld [vmem:[#allocation17 + $0x14] sm:$0xf]
        %v1716 = vld [vmem:[#allocation17 + $0x18] sm:$0xf]
        %v1717 = vld [vmem:[#allocation17 + $0x1c] sm:$0xf]
        %v1718 = vld [vmem:[#allocation17 + $0x20] sm:$0xf]
        %v1719 = vld [vmem:[#allocation17 + $0x24] sm:$0xf]
        %v1720 = vld [vmem:[#allocation17 + $0x28] sm:$0xf]
        %v1721 = vld [vmem:[#allocation17 + $0x2c] sm:$0xf]
        %v1722 = vld [vmem:[#allocation17 + $0x30] sm:$0xf]
        %v1723 = vld [vmem:[#allocation17 + $0x34] sm:$0xf]
        %v1724 = vld [vmem:[#allocation17 + $0x38] sm:$0xf]
        %v1725 = vld [vmem:[#allocation17 + $0x3c] sm:$0xf]
        %v1726 = vld [vmem:[#allocation17 + $0x40] sm:$0xf]
        %v1727 = vld [vmem:[#allocation17 + $0x44] sm:$0xf]
        %v1728 = vld [vmem:[#allocation17 + $0x48] sm:$0xf]
        %v1729 = vld [vmem:[#allocation17 + $0x4c] sm:$0xf]
        %v1730 = vld [vmem:[#allocation17 + $0x50] sm:$0xf]
        %v1731 = vld [vmem:[#allocation17 + $0x54] sm:$0xf]
        %v1732 = vld [vmem:[#allocation17 + $0x58] sm:$0xf]
        %v1733 = vld [vmem:[#allocation17 + $0x5c] sm:$0xf]
        %v1734 = vld [vmem:[#allocation17 + $0x60] sm:$0xf]
        %v1735 = vld [vmem:[#allocation17 + $0x64] sm:$0xf]
        %v1736 = vld [vmem:[#allocation17 + $0x68] sm:$0xf]
        %v1737 = vld [vmem:[#allocation17 + $0x6c] sm:$0xf]
        %v1738 = vld [vmem:[#allocation17 + $0x70] sm:$0xf]
        %v1739 = vld [vmem:[#allocation17 + $0x74] sm:$0xf]
        %v1740 = vld [vmem:[#allocation17 + $0x78] sm:$0xf]
        %v1741 = vld [vmem:[#allocation17 + $0x7c] sm:$0xf]
        %v1742 = vld [vmem:[#allocation17 + $0x80] sm:$0xf]
        %v1743 = vld [vmem:[#allocation17 + $0x84] sm:$0xf]
        %v1744 = vld [vmem:[#allocation17 + $0x88] sm:$0xf]
        %v1745 = vld [vmem:[#allocation17 + $0x8c] sm:$0xf]
        %v1746 = vld [vmem:[#allocation17 + $0x90] sm:$0xf]
        %v1747 = vld [vmem:[#allocation17 + $0x94] sm:$0xf]
        %v1748 = vld [vmem:[#allocation17 + $0x98] sm:$0xf]
        %v1749 = vld [vmem:[#allocation17 + $0x9c] sm:$0xf]
        %v1750 = vld [vmem:[#allocation17 + $0xa0] sm:$0xf]
        %v1751 = vld [vmem:[#allocation17 + $0xa4] sm:$0xf]
        %v1752 = vld [vmem:[#allocation17 + $0xa8] sm:$0xf]
        %v1753 = vld [vmem:[#allocation17 + $0xac] sm:$0xf]
        %v1754 = vld [vmem:[#allocation17 + $0xb0] sm:$0xf]
        %v1755 = vld [vmem:[#allocation17 + $0xb4] sm:$0xf]
        %v1756 = vld [vmem:[#allocation17 + $0xb8] sm:$0xf]
        %v1757 = vld [vmem:[#allocation17 + $0xbc] sm:$0xf]
        %v1758 = vld [vmem:[#allocation17 + $0xc0] sm:$0xf]
        %v1759 = vld [vmem:[#allocation17 + $0xc4] sm:$0xf]
        %v1760 = vld [vmem:[#allocation17 + $0xc8] sm:$0xf]
        %v1761 = vld [vmem:[#allocation17 + $0xcc] sm:$0xf]
        %v1762 = vld [vmem:[#allocation17 + $0xd0] sm:$0xf]
        %v1763 = vld [vmem:[#allocation17 + $0xd4] sm:$0xf]
        %v1764 = vld [vmem:[#allocation17 + $0xd8] sm:$0xf]
        %v1765 = vld [vmem:[#allocation17 + $0xdc] sm:$0xf]
        %v1766 = vld [vmem:[#allocation17 + $0xe0] sm:$0xf]
        %v1767 = vld [vmem:[#allocation17 + $0xe4] sm:$0xf]
        %v1768 = vld [vmem:[#allocation17 + $0xe8] sm:$0xf]
        %v1769 = vld [vmem:[#allocation17 + $0xec] sm:$0xf]
        %v1770 = vld [vmem:[#allocation17 + $0xf0] sm:$0xf]
        %v1771 = vld [vmem:[#allocation17 + $0xf4] sm:$0xf]
        %v1772 = vld [vmem:[#allocation17 + $0xf8] sm:$0xf]
        %v1773 = vld [vmem:[#allocation17 + $0xfc] sm:$0xf]
        %v1774 = vld [vmem:[%s12] sm:$0x1]
        %v1776 = vperm.slane %v1774, 0
        %v1842 = vunpack.c.l.b16 %v1710
        %v1843 = vunpack.c.l.b16 %v1711
        %v1844 = vunpack.c.l.b16 %v1712
        %v1845 = vunpack.c.l.b16 %v1713
        %v1846 = vunpack.c.l.b16 %v1714
        %v1847 = vunpack.c.l.b16 %v1715
        %v1848 = vunpack.c.l.b16 %v1716
        %v1849 = vunpack.c.l.b16 %v1717
        %v1850 = vunpack.c.l.b16 %v1718
        %v1851 = vunpack.c.l.b16 %v1719
        %v1852 = vunpack.c.l.b16 %v1720
        %v1853 = vunpack.c.l.b16 %v1721
        %v1854 = vunpack.c.l.b16 %v1722
        %v1855 = vunpack.c.l.b16 %v1723
        %v1856 = vunpack.c.l.b16 %v1724
        %v1857 = vunpack.c.l.b16 %v1725
        %v1858 = vunpack.c.l.b16 %v1726
        %v1859 = vunpack.c.l.b16 %v1727
        %v1860 = vunpack.c.l.b16 %v1728
        %v1861 = vunpack.c.l.b16 %v1729
        %v1862 = vunpack.c.l.b16 %v1730
        %v1863 = vunpack.c.l.b16 %v1731
        %v1864 = vunpack.c.l.b16 %v1732
        %v1865 = vunpack.c.l.b16 %v1733
        %v1866 = vunpack.c.l.b16 %v1734
        %v1867 = vunpack.c.l.b16 %v1735
        %v1868 = vunpack.c.l.b16 %v1736
        %v1869 = vunpack.c.l.b16 %v1737
        %v1870 = vunpack.c.l.b16 %v1738
        %v1871 = vunpack.c.l.b16 %v1739
        %v1872 = vunpack.c.l.b16 %v1740
        %v1873 = vunpack.c.l.b16 %v1741
        %v1874 = vunpack.c.l.b16 %v1742
        %v1875 = vunpack.c.l.b16 %v1743
        %v1876 = vunpack.c.l.b16 %v1744
        %v1877 = vunpack.c.l.b16 %v1745
        %v1878 = vunpack.c.l.b16 %v1746
        %v1879 = vunpack.c.l.b16 %v1747
        %v1880 = vunpack.c.l.b16 %v1748
        %v1881 = vunpack.c.l.b16 %v1749
        %v1882 = vunpack.c.l.b16 %v1750
        %v1883 = vunpack.c.l.b16 %v1751
        %v1884 = vunpack.c.l.b16 %v1752
        %v1885 = vunpack.c.l.b16 %v1753
        %v1886 = vunpack.c.l.b16 %v1754
        %v1887 = vunpack.c.l.b16 %v1755
        %v1888 = vunpack.c.l.b16 %v1756
        %v1889 = vunpack.c.l.b16 %v1757
        %v1890 = vunpack.c.l.b16 %v1758
        %v1891 = vunpack.c.l.b16 %v1759
        %v1892 = vunpack.c.l.b16 %v1760
        %v1893 = vunpack.c.l.b16 %v1761
        %v1894 = vunpack.c.l.b16 %v1762
        %v1895 = vunpack.c.l.b16 %v1763
        %v1896 = vunpack.c.l.b16 %v1764
        %v1897 = vunpack.c.l.b16 %v1765
        %v1898 = vunpack.c.l.b16 %v1766
        %v1899 = vunpack.c.l.b16 %v1767
        %v1900 = vunpack.c.l.b16 %v1768
        %v1901 = vunpack.c.l.b16 %v1769
        %v1902 = vunpack.c.l.b16 %v1770
        %v1903 = vunpack.c.l.b16 %v1771
        %v1904 = vunpack.c.l.b16 %v1772
        %v1905 = vunpack.c.l.b16 %v1773
        %v1906 = vpack.c.b16 %v1843, %v1842
        %v1907 = vpack.c.b16 %v1845, %v1844
        %v1908 = vpack.c.b16 %v1847, %v1846
        %v1909 = vpack.c.b16 %v1849, %v1848
        %v1910 = vpack.c.b16 %v1851, %v1850
        %v1911 = vpack.c.b16 %v1853, %v1852
        %v1912 = vpack.c.b16 %v1855, %v1854
        %v1913 = vpack.c.b16 %v1857, %v1856
        %v1914 = vpack.c.b16 %v1859, %v1858
        %v1915 = vpack.c.b16 %v1861, %v1860
        %v1916 = vpack.c.b16 %v1863, %v1862
        %v1917 = vpack.c.b16 %v1865, %v1864
        %v1918 = vpack.c.b16 %v1867, %v1866
        %v1919 = vpack.c.b16 %v1869, %v1868
        %v1920 = vpack.c.b16 %v1871, %v1870
        %v1921 = vpack.c.b16 %v1873, %v1872
        %v1922 = vpack.c.b16 %v1875, %v1874
        %v1923 = vpack.c.b16 %v1877, %v1876
        %v1924 = vpack.c.b16 %v1879, %v1878
        %v1925 = vpack.c.b16 %v1881, %v1880
        %v1926 = vpack.c.b16 %v1883, %v1882
        %v1927 = vpack.c.b16 %v1885, %v1884
        %v1928 = vpack.c.b16 %v1887, %v1886
        %v1929 = vpack.c.b16 %v1889, %v1888
        %v1930 = vpack.c.b16 %v1891, %v1890
        %v1931 = vpack.c.b16 %v1893, %v1892
        %v1932 = vpack.c.b16 %v1895, %v1894
        %v1933 = vpack.c.b16 %v1897, %v1896
        %v1934 = vpack.c.b16 %v1899, %v1898
        %v1935 = vpack.c.b16 %v1901, %v1900
        %v1936 = vpack.c.b16 %v1903, %v1902
        %v1937 = vpack.c.b16 %v1905, %v1904
        %1970 = vmatpush.bf16.msra.mxu0 %v1913
        %1971 = vmatpush.bf16.msra.mxu0 %v1912
        %1972 = vmatpush.bf16.msra.mxu0 %v1911
        %1973 = vmatpush.bf16.msra.mxu0 %v1910
        %1974 = vmatpush.bf16.msra.mxu0 %v1909
        %1975 = vmatpush.bf16.msra.mxu0 %v1908
        %1976 = vmatpush.bf16.msra.mxu0 %v1907
        %1977 = vmatpush.bf16.msra.mxu0 %v1906
        %1978 = vmatmul.bf16.gmra.mxu0 %v1706
        %v1979 = vpop.f32.mrf.mxu0
        %v1980 = vadd.f32 %v1776, %v1979
        %v1981 = vpop.f32.mrf.mxu0
        %1982 = vdwg.mxu0
        %1983 = vmatpush.bf16.msra.mxu0 %v1921
        %1984 = vmatpush.bf16.msra.mxu0 %v1920
        %1985 = vmatpush.bf16.msra.mxu0 %v1919
        %1986 = vmatpush.bf16.msra.mxu0 %v1918
        %1987 = vmatpush.bf16.msra.mxu0 %v1917
        %1988 = vmatpush.bf16.msra.mxu0 %v1916
        %1989 = vmatpush.bf16.msra.mxu0 %v1915
        %1990 = vmatpush.bf16.msra.mxu0 %v1914
        %1991 = vmatmul.bf16.gmra.mxu0 %v1707
        %v1992 = vpop.f32.mrf.mxu0
        %v1993 = vadd.f32 %v1980, %v1992
        %v1994 = vpop.f32.mrf.mxu0
        %1995 = vdwg.mxu0
        %1996 = vmatpush.bf16.msra.mxu0 %v1929
        %1997 = vmatpush.bf16.msra.mxu0 %v1928
        %1998 = vmatpush.bf16.msra.mxu0 %v1927
        %1999 = vmatpush.bf16.msra.mxu0 %v1926
        %2000 = vmatpush.bf16.msra.mxu0 %v1925
        %2001 = vmatpush.bf16.msra.mxu0 %v1924
        %2002 = vmatpush.bf16.msra.mxu0 %v1923
        %2003 = vmatpush.bf16.msra.mxu0 %v1922
        %2004 = vmatmul.bf16.gmra.mxu0 %v1708
        %v2005 = vpop.f32.mrf.mxu0
        %v2006 = vadd.f32 %v1993, %v2005
        %v2007 = vpop.f32.mrf.mxu0
        %2008 = vdwg.mxu0
        %2009 = vmatpush.bf16.msra.mxu0 %v1937
        %2010 = vmatpush.bf16.msra.mxu0 %v1936
        %2011 = vmatpush.bf16.msra.mxu0 %v1935
        %2012 = vmatpush.bf16.msra.mxu0 %v1934
        %2013 = vmatpush.bf16.msra.mxu0 %v1933
        %2014 = vmatpush.bf16.msra.mxu0 %v1932
        %2015 = vmatpush.bf16.msra.mxu0 %v1931
        %2016 = vmatpush.bf16.msra.mxu0 %v1930
        %2017 = vmatmul.bf16.gmra.mxu0 %v1709
        %v2018 = vpop.f32.mrf.mxu0
        %v2019 = vadd.f32 %v2006, %v2018
        %v2020 = vpop.f32.mrf.mxu0
        %2021 = vdwg.mxu0
        %v2022 = vadd.f32 %v1260, %v2019
        %2023 = vst [vmem:[%s596] sm:$0xff] %v2022
        %s2024 = sand.u32 %s321, 1
        %s2025 = scalar_lea.sflag [#allocation4], %s2024
        %s2026 = sand.u32 %s321, 1
        %s2027 = smul.addr %s2026, 8
        %s2028 = scalar_lea.vmem [#allocation19], %s2027
        // Predicated region
        $region113: #{tpu_custom_call.1} parent=71 // pred_check
          %p2029 = pneg %p331
        $region114: #{tpu_custom_call.1} parent=71 // pred_check_branch
          %2031 = sbr.rel (%p2029) target = $region116
        $region115: #{tpu_custom_call.1} parent=71 // pred_region
          %2033 = vsyncadd %s2025, 0
          %s2034 = smul.addr %s35, 8
          %s2035 = scalar_lea.hbm %s13, %s2034
          %s2037 = sshll.u32 %s2028, 4
          %s2038 = int_to_ptr.vmem [resolvable:$true] %s2037
          %s2039 = sshll.u32 %s2035, 4
          %s2040 = int_to_ptr.hbm [resolvable:$true] %s2039
          %2042 = dma.vmem_to_hbm [thread:$0]  %s2038, 128, %s2040, %s2025
        $region116: #{tpu_custom_call.1} parent=71 // pred_fallthru
          _
      $region72: #{tpu_custom_call.1} parent=5 // pred_fallthru
        _
      %p2043 = scmp.le.s32.totalorder 2, %s30
      // Predicated region
      $region117: #{tpu_custom_call.1} parent=5 // pred_check
        %p2044 = pneg %p2043
      $region118: #{tpu_custom_call.1} parent=5 // pred_check_branch
        %2046 = sbr.rel (%p2044) target = $region120
      $region119: #{tpu_custom_call.1} parent=5 // pred_region
        %s2047 = ssub.s32 %s30, 2
        // Predicated region
        $region121: #{tpu_custom_call.1} parent=119 // pred_check
          %p2048 = pneg %p337
        $region122: #{tpu_custom_call.1} parent=119 // pred_check_branch
          %2050 = sbr.rel (%p2048) target = $region124
        $region123: #{tpu_custom_call.1} parent=119 // pred_region
          %s2051 = sand.u32 %s322, 1
          %s2052 = scalar_lea.sflag [#allocation4], %s2051
          %s2053 = sand.u32 %s322, 1
          %s2054 = smul.addr %s2053, 8
          %s2055 = scalar_lea.vmem [#allocation19], %s2054
          %2057 = dma.done %s2052, 128
        $region124: #{tpu_custom_call.1} parent=119 // pred_fallthru
          _
      $region120: #{tpu_custom_call.1} parent=5 // pred_fallthru
        _
    $region6: #{tpu_custom_call.1} parent=1 // loop_footer
      %s34 = sadd.s32 1, %s30
    $region7: #{tpu_custom_call.1} parent=1 // loop_footer_branch
      %29 = sbr.rel target = $region3
    $region8: #{tpu_custom_call.1} parent=1 // loop_exit
      _
    %2058 = vsyncpa [#allocation3], 1
    %s2059 = scalar_lea.sflag [#allocation3], 1
    %2060 = vsyncpa %s2059, 1
    %2061 = vsyncpa [#allocation6], 1
    %2062 = vsyncpa [#allocation9], 1
    %2063 = vsyncpa [#allocation12], 1
    %2064 = vsyncpa [#allocation15], 1
    %2065 = vsyncpa [#allocation18], 1
    %2066 = vsyncpa [#allocation4], 1
    %s2067 = scalar_lea.sflag [#allocation4], 1
    %2068 = vsyncpa %s2067, 1

</llo_original>
